<compile_context>
chip_gen: v5e
topology: v5e:2x2
jax: 0.10.0
libtpu: 0.0.40
codegen_flags: <defaults>
</compile_context>

<pallas_src>
import math

import jax
import jax.numpy as jnp
from jax.experimental import pallas as pl
from jax.experimental.pallas import tpu as pltpu

EPS = 1e-5


def _bn_train(y):
    # Training-mode BatchNorm2d at fresh init (gamma=1, beta=0): normalize with
    # biased batch variance.  Single-pass stats: mean and E[x^2] in one sweep,
    # var = E[x^2] - mean^2 (clamped at 0 against f32 cancellation).
    mean = jnp.mean(y, axis=0, keepdims=True)
    mean_sq = jnp.mean(y * y, axis=0, keepdims=True)
    var = jnp.maximum(mean_sq - mean * mean, 0.0)
    return (y - mean) * jax.lax.rsqrt(var + EPS)


def _make_fused_kernel(n_blocks, widen_flags, n_images, height):
    """Builds the fused whole-network kernel.

    Ref order: x, stem_w, (w1_i, w2_i)*n_blocks, fc_w, fc_b, out.
    """

    def kernel(*refs):
        it = iter(refs)
        x_ref = next(it)
        stem_w_ref = next(it)
        blk_refs = [(next(it), next(it)) for _ in range(n_blocks)]
        fcw_ref = next(it)
        fcb_ref = next(it)
        o_ref = next(it)

        def mm(a_bf16, w_ref):
            # bf16 operands, f32 accumulation on the MXU.
            return jnp.dot(a_bf16, w_ref[...], preferred_element_type=jnp.float32)

        # Stem: conv1 (1 x row_size conv == matmul over W) + bn1 + relu.
        # The resident slab `y` lives in bf16 between layers; BN stats,
        # residual adds, pooling and the FC stay in f32.
        y = jnp.maximum(_bn_train(mm(x_ref[...], stem_w_ref)), 0.0)
        y = y.astype(jnp.bfloat16)

        # BasicBlocks, all on the VMEM-resident slab.
        for i, (w1_ref, w2_ref) in enumerate(blk_refs):
            if widen_flags[i]:
                # identity = torch.cat((x, x), 3): exact lane concat (no matmul,
                # no extra HBM inputs).
                yf = y.astype(jnp.float32)
                identity = jnp.concatenate([yf, yf], axis=1)
            else:
                identity = y.astype(jnp.float32)
            t = jnp.maximum(_bn_train(mm(y, w1_ref)), 0.0).astype(jnp.bfloat16)
            u = _bn_train(mm(t, w2_ref))
            y = jnp.maximum(u + identity, 0.0).astype(jnp.bfloat16)

        # Head: AdaptiveAvgPool2d((1, 1)) over H == per-image mean over the H
        # rows of the resident slab (reshape + mean, no pooling matrix), then
        # Linear(512 -> 1).
        c_out = y.shape[-1]
        y_f32 = y.astype(jnp.float32)
        pooled = jnp.mean(y_f32.reshape(n_images, height, c_out), axis=1)
        o_ref[...] = (jnp.sum(pooled * fcw_ref[...], axis=-1, keepdims=True)
                      + fcb_ref[...])

    return kernel


def _vmem_limit_bytes(est_bytes):
    # Generation-aware budget: leave headroom below physical VMEM for Mosaic
    # internal scratch (~52 MiB usable on v7x's 64 MiB, ~104 MiB on v5e/v6e's
    # 128 MiB parts).
    try:
        cap = int(pltpu.get_tpu_info().vmem_capacity_bytes)
    except Exception:  # interpret mode / query unavailable -> conservative
        cap = 64 << 20
    ceiling = (cap * 13) // 16
    return int(min(max(est_bytes, 16 << 20), ceiling))


def model_forward(x_nchw, params):
    N, C, H, W = x_nchw.shape
    assert C == 1
    rows = N * H
    # NCHW (N,1,H,W) -> (N*H, W) row-major slab; bf16 matmul operand.
    x = x_nchw.reshape(rows, W).astype(jnp.bfloat16)

    stem_w = params["stem_w"].astype(jnp.bfloat16)
    blk_ws, widen_flags = [], []
    for blk in params["blocks"]:
        K, P = blk["w1"].shape
        widen = K != P
        widen_flags.append(widen)
        if widen:
            assert 2 * K == P
        blk_ws.append(blk["w1"].astype(jnp.bfloat16))
        blk_ws.append(blk["w2"].astype(jnp.bfloat16))

    c_out = params["blocks"][-1]["w2"].shape[1]
    fc_w = params["fc_w"].astype(jnp.float32)   # (1, c_out)
    fc_b = params["fc_b"].astype(jnp.float32)   # (1, 1)

    inputs = [x, stem_w, *blk_ws, fc_w, fc_b]

    in_bytes = sum(int(a.size) * jnp.dtype(a.dtype).itemsize for a in inputs)
    # resident bf16 slab + a few live f32 temporaries per block
    act_bytes = rows * c_out * (2 * 2 + 4 * 4)
    vmem_limit = _vmem_limit_bytes(in_bytes + act_bytes + (4 << 20))

    kernel = _make_fused_kernel(len(params["blocks"]), tuple(widen_flags), N, H)
    return pl.pallas_call(
        kernel,
        out_shape=jax.ShapeDtypeStruct((N, 1), jnp.float32),
        in_specs=[pl.BlockSpec(memory_space=pltpu.MemorySpace.VMEM)
                  for _ in inputs],
        out_specs=pl.BlockSpec(memory_space=pltpu.MemorySpace.VMEM),
        compiler_params=pltpu.CompilerParams(vmem_limit_bytes=vmem_limit),
    )(*inputs)


# jit so constant prep (reshape, bf16 weight casts) folds into the program and
# only the fused pallas_call runs per step.
model_forward_jit = jax.jit(model_forward)


# ---------------- deterministic parameter init ----------------

def init_params(key, row_size, layers):
    keys = iter(jax.random.split(key, 64))

    def conv_w(k_in, p_out, rng):
        # kaiming_normal_(mode='fan_out', relu): fan_out = p_out * 1 * k_in
        std = math.sqrt(2.0 / (p_out * k_in))
        return std * jax.random.normal(rng, (k_in, p_out), dtype=jnp.float32)

    params = {"stem_w": conv_w(row_size, 64, next(keys))}

    blocks = []
    layer_cfg = [(64, 64, layers[0]), (128, 64, layers[1]),
                 (256, 128, layers[2]), (512, 256, layers[3])]
    for planes, ksize, nblocks in layer_cfg:
        for kin in [ksize] + [planes] * (nblocks - 1):
            blocks.append(dict(w1=conv_w(kin, planes, next(keys)),
                               w2=conv_w(planes, planes, next(keys))))
    params["blocks"] = blocks

    bound = 1.0 / math.sqrt(512.0)
    params["fc_w"] = jax.random.uniform(next(keys), (1, 512), jnp.float32, -bound, bound)
    params["fc_b"] = jax.random.uniform(next(keys), (1, 1), jnp.float32, -bound, bound)
    return params


# ---------------- pure-JAX f32 reference for validation ----------------

def ref_forward(x_nchw, params):
    N, C, H, W = x_nchw.shape
    y = x_nchw.reshape(N * H, W)

    def bn(v):
        m = jnp.mean(v, axis=0, keepdims=True)
        var = jnp.mean((v - m) ** 2, axis=0, keepdims=True)
        return (v - m) * jax.lax.rsqrt(var + EPS)

    y = jnp.maximum(bn(y @ params["stem_w"]), 0.0)
    for blk in params["blocks"]:
        K, P = blk["w1"].shape
        idn = y if K == P else jnp.concatenate([y, y], axis=1)
        t = jnp.maximum(bn(y @ blk["w1"]), 0.0)
        u = bn(t @ blk["w2"])
        y = jnp.maximum(u + idn, 0.0)
    pooled = jnp.mean(y.reshape(N, H, -1), axis=1)
    return jnp.sum(pooled * params["fc_w"], axis=-1, keepdims=True) + params["fc_b"]


if __name__ == "__main__":
    row_size = 16
    layers = [1, 1, 1, 1]
    N, H = 2, 8

    key = jax.random.PRNGKey(0)
    kx, kp = jax.random.split(key)
    x = jax.random.normal(kx, (N, 1, H, row_size), dtype=jnp.float32)  # NCHW
    params = init_params(kp, row_size, layers)

    out = jax.block_until_ready(model_forward_jit(x, params))
    ref = ref_forward(x, params)

    assert out.shape == (N, 1)
    # bf16 matmul operands / bf16 resident slab (f32 accumulate & BN stats)
    # -> relaxed tolerance vs the f32 reference.
    assert jnp.allclose(out, ref, rtol=5e-2, atol=5e-2), (out, ref)
    print("KERNEL_OK")
</pallas_src>

<mosaic_0001>
module attributes {stable_mosaic.version = 11 : i64} {
  func.func @kernel(%arg0: memref<16x16xbf16, #tpu.memory_space<vmem>>, %arg1: memref<16x64xbf16, #tpu.memory_space<vmem>>, %arg2: memref<64x64xbf16, #tpu.memory_space<vmem>>, %arg3: memref<64x64xbf16, #tpu.memory_space<vmem>>, %arg4: memref<64x128xbf16, #tpu.memory_space<vmem>>, %arg5: memref<128x128xbf16, #tpu.memory_space<vmem>>, %arg6: memref<128x256xbf16, #tpu.memory_space<vmem>>, %arg7: memref<256x256xbf16, #tpu.memory_space<vmem>>, %arg8: memref<256x512xbf16, #tpu.memory_space<vmem>>, %arg9: memref<512x512xbf16, #tpu.memory_space<vmem>>, %arg10: memref<1x512xf32, #tpu.memory_space<vmem>>, %arg11: memref<1x1xf32, #tpu.memory_space<vmem>>, %arg12: memref<2x1xf32, #tpu.memory_space<vmem>>) attributes {dimension_semantics = [], scalar_prefetch = 0 : i64, scratch_operands = 0 : i64, tpu.core_type = #tpu.core_type<tc>} {
    %c0 = arith.constant 0 : index
    %c0_0 = arith.constant 0 : index
    %0 = vector.load %arg0[%c0, %c0_0] : memref<16x16xbf16, #tpu.memory_space<vmem>>, vector<16x16xbf16>
    %c0_1 = arith.constant 0 : index
    %c0_2 = arith.constant 0 : index
    %1 = vector.load %arg1[%c0_1, %c0_2] : memref<16x64xbf16, #tpu.memory_space<vmem>>, vector<16x64xbf16>
    %cst = arith.constant dense<0.000000e+00> : vector<16x64xf32>
    %2 = tpu.matmul %0, %1, %cst {dimension_numbers = #tpu.dot_dimension_numbers<[1], [0], [0], [1], [0, 0, 1, 1], [], []>} : vector<16x16xbf16>, vector<16x64xbf16>, vector<16x64xf32> -> vector<16x64xf32>
    %cst_3 = arith.constant dense<0.000000e+00> : vector<64xf32>
    %3 = vector.multi_reduction <add>, %2, %cst_3 [0] : vector<16x64xf32> to vector<64xf32>
    %4 = vector.shape_cast %3 : vector<64xf32> to vector<1x64xf32>
    %cst_4 = arith.constant 1.600000e+01 : f32
    %5 = vector.broadcast %cst_4 : f32 to vector<1x64xf32>
    %6 = arith.divf %4, %5 : vector<1x64xf32>
    %7 = arith.mulf %2, %2 : vector<16x64xf32>
    %cst_5 = arith.constant dense<0.000000e+00> : vector<64xf32>
    %8 = vector.multi_reduction <add>, %7, %cst_5 [0] : vector<16x64xf32> to vector<64xf32>
    %9 = vector.shape_cast %8 : vector<64xf32> to vector<1x64xf32>
    %cst_6 = arith.constant 1.600000e+01 : f32
    %10 = vector.broadcast %cst_6 : f32 to vector<1x64xf32>
    %11 = arith.divf %9, %10 : vector<1x64xf32>
    %12 = arith.mulf %6, %6 : vector<1x64xf32>
    %13 = arith.subf %11, %12 : vector<1x64xf32>
    %cst_7 = arith.constant 0.000000e+00 : f32
    %14 = vector.broadcast %cst_7 : f32 to vector<1x64xf32>
    %15 = arith.maximumf %13, %14 : vector<1x64xf32>
    %16 = vector.broadcast %6 : vector<1x64xf32> to vector<16x64xf32>
    %17 = arith.subf %2, %16 : vector<16x64xf32>
    %cst_8 = arith.constant 9.99999974E-6 : f32
    %18 = vector.broadcast %cst_8 : f32 to vector<1x64xf32>
    %19 = arith.addf %15, %18 : vector<1x64xf32>
    %20 = math.rsqrt %19 : vector<1x64xf32>
    %21 = vector.broadcast %20 : vector<1x64xf32> to vector<16x64xf32>
    %22 = arith.mulf %17, %21 : vector<16x64xf32>
    %cst_9 = arith.constant 0.000000e+00 : f32
    %23 = vector.broadcast %cst_9 : f32 to vector<16x64xf32>
    %24 = arith.maximumf %22, %23 : vector<16x64xf32>
    %25 = arith.truncf %24 : vector<16x64xf32> to vector<16x64xbf16>
    %26 = arith.extf %25 : vector<16x64xbf16> to vector<16x64xf32>
    %c0_10 = arith.constant 0 : index
    %c0_11 = arith.constant 0 : index
    %27 = vector.load %arg2[%c0_10, %c0_11] : memref<64x64xbf16, #tpu.memory_space<vmem>>, vector<64x64xbf16>
    %cst_12 = arith.constant dense<0.000000e+00> : vector<16x64xf32>
    %28 = tpu.matmul %25, %27, %cst_12 {dimension_numbers = #tpu.dot_dimension_numbers<[1], [0], [0], [1], [0, 0, 1, 1], [], []>} : vector<16x64xbf16>, vector<64x64xbf16>, vector<16x64xf32> -> vector<16x64xf32>
    %cst_13 = arith.constant dense<0.000000e+00> : vector<64xf32>
    %29 = vector.multi_reduction <add>, %28, %cst_13 [0] : vector<16x64xf32> to vector<64xf32>
    %30 = vector.shape_cast %29 : vector<64xf32> to vector<1x64xf32>
    %cst_14 = arith.constant 1.600000e+01 : f32
    %31 = vector.broadcast %cst_14 : f32 to vector<1x64xf32>
    %32 = arith.divf %30, %31 : vector<1x64xf32>
    %33 = arith.mulf %28, %28 : vector<16x64xf32>
    %cst_15 = arith.constant dense<0.000000e+00> : vector<64xf32>
    %34 = vector.multi_reduction <add>, %33, %cst_15 [0] : vector<16x64xf32> to vector<64xf32>
    %35 = vector.shape_cast %34 : vector<64xf32> to vector<1x64xf32>
    %cst_16 = arith.constant 1.600000e+01 : f32
    %36 = vector.broadcast %cst_16 : f32 to vector<1x64xf32>
    %37 = arith.divf %35, %36 : vector<1x64xf32>
    %38 = arith.mulf %32, %32 : vector<1x64xf32>
    %39 = arith.subf %37, %38 : vector<1x64xf32>
    %cst_17 = arith.constant 0.000000e+00 : f32
    %40 = vector.broadcast %cst_17 : f32 to vector<1x64xf32>
    %41 = arith.maximumf %39, %40 : vector<1x64xf32>
    %42 = vector.broadcast %32 : vector<1x64xf32> to vector<16x64xf32>
    %43 = arith.subf %28, %42 : vector<16x64xf32>
    %cst_18 = arith.constant 9.99999974E-6 : f32
    %44 = vector.broadcast %cst_18 : f32 to vector<1x64xf32>
    %45 = arith.addf %41, %44 : vector<1x64xf32>
    %46 = math.rsqrt %45 : vector<1x64xf32>
    %47 = vector.broadcast %46 : vector<1x64xf32> to vector<16x64xf32>
    %48 = arith.mulf %43, %47 : vector<16x64xf32>
    %cst_19 = arith.constant 0.000000e+00 : f32
    %49 = vector.broadcast %cst_19 : f32 to vector<16x64xf32>
    %50 = arith.maximumf %48, %49 : vector<16x64xf32>
    %51 = arith.truncf %50 : vector<16x64xf32> to vector<16x64xbf16>
    %c0_20 = arith.constant 0 : index
    %c0_21 = arith.constant 0 : index
    %52 = vector.load %arg3[%c0_20, %c0_21] : memref<64x64xbf16, #tpu.memory_space<vmem>>, vector<64x64xbf16>
    %cst_22 = arith.constant dense<0.000000e+00> : vector<16x64xf32>
    %53 = tpu.matmul %51, %52, %cst_22 {dimension_numbers = #tpu.dot_dimension_numbers<[1], [0], [0], [1], [0, 0, 1, 1], [], []>} : vector<16x64xbf16>, vector<64x64xbf16>, vector<16x64xf32> -> vector<16x64xf32>
    %cst_23 = arith.constant dense<0.000000e+00> : vector<64xf32>
    %54 = vector.multi_reduction <add>, %53, %cst_23 [0] : vector<16x64xf32> to vector<64xf32>
    %55 = vector.shape_cast %54 : vector<64xf32> to vector<1x64xf32>
    %cst_24 = arith.constant 1.600000e+01 : f32
    %56 = vector.broadcast %cst_24 : f32 to vector<1x64xf32>
    %57 = arith.divf %55, %56 : vector<1x64xf32>
    %58 = arith.mulf %53, %53 : vector<16x64xf32>
    %cst_25 = arith.constant dense<0.000000e+00> : vector<64xf32>
    %59 = vector.multi_reduction <add>, %58, %cst_25 [0] : vector<16x64xf32> to vector<64xf32>
    %60 = vector.shape_cast %59 : vector<64xf32> to vector<1x64xf32>
    %cst_26 = arith.constant 1.600000e+01 : f32
    %61 = vector.broadcast %cst_26 : f32 to vector<1x64xf32>
    %62 = arith.divf %60, %61 : vector<1x64xf32>
    %63 = arith.mulf %57, %57 : vector<1x64xf32>
    %64 = arith.subf %62, %63 : vector<1x64xf32>
    %cst_27 = arith.constant 0.000000e+00 : f32
    %65 = vector.broadcast %cst_27 : f32 to vector<1x64xf32>
    %66 = arith.maximumf %64, %65 : vector<1x64xf32>
    %67 = vector.broadcast %57 : vector<1x64xf32> to vector<16x64xf32>
    %68 = arith.subf %53, %67 : vector<16x64xf32>
    %cst_28 = arith.constant 9.99999974E-6 : f32
    %69 = vector.broadcast %cst_28 : f32 to vector<1x64xf32>
    %70 = arith.addf %66, %69 : vector<1x64xf32>
    %71 = math.rsqrt %70 : vector<1x64xf32>
    %72 = vector.broadcast %71 : vector<1x64xf32> to vector<16x64xf32>
    %73 = arith.mulf %68, %72 : vector<16x64xf32>
    %74 = arith.addf %73, %26 : vector<16x64xf32>
    %cst_29 = arith.constant 0.000000e+00 : f32
    %75 = vector.broadcast %cst_29 : f32 to vector<16x64xf32>
    %76 = arith.maximumf %74, %75 : vector<16x64xf32>
    %77 = arith.truncf %76 : vector<16x64xf32> to vector<16x64xbf16>
    %78 = arith.extf %77 : vector<16x64xbf16> to vector<16x64xf32>
    %79 = tpu.concatenate %78, %78 in 1 : vector<16x64xf32>, vector<16x64xf32> -> vector<16x128xf32>
    %c0_30 = arith.constant 0 : index
    %c0_31 = arith.constant 0 : index
    %80 = vector.load %arg4[%c0_30, %c0_31] : memref<64x128xbf16, #tpu.memory_space<vmem>>, vector<64x128xbf16>
    %cst_32 = arith.constant dense<0.000000e+00> : vector<16x128xf32>
    %81 = tpu.matmul %77, %80, %cst_32 {dimension_numbers = #tpu.dot_dimension_numbers<[1], [0], [0], [1], [0, 0, 1, 1], [], []>} : vector<16x64xbf16>, vector<64x128xbf16>, vector<16x128xf32> -> vector<16x128xf32>
    %cst_33 = arith.constant dense<0.000000e+00> : vector<128xf32>
    %82 = vector.multi_reduction <add>, %81, %cst_33 [0] : vector<16x128xf32> to vector<128xf32>
    %83 = vector.shape_cast %82 : vector<128xf32> to vector<1x128xf32>
    %cst_34 = arith.constant 1.600000e+01 : f32
    %84 = vector.broadcast %cst_34 : f32 to vector<1x128xf32>
    %85 = arith.divf %83, %84 : vector<1x128xf32>
    %86 = arith.mulf %81, %81 : vector<16x128xf32>
    %cst_35 = arith.constant dense<0.000000e+00> : vector<128xf32>
    %87 = vector.multi_reduction <add>, %86, %cst_35 [0] : vector<16x128xf32> to vector<128xf32>
    %88 = vector.shape_cast %87 : vector<128xf32> to vector<1x128xf32>
    %cst_36 = arith.constant 1.600000e+01 : f32
    %89 = vector.broadcast %cst_36 : f32 to vector<1x128xf32>
    %90 = arith.divf %88, %89 : vector<1x128xf32>
    %91 = arith.mulf %85, %85 : vector<1x128xf32>
    %92 = arith.subf %90, %91 : vector<1x128xf32>
    %cst_37 = arith.constant 0.000000e+00 : f32
    %93 = vector.broadcast %cst_37 : f32 to vector<1x128xf32>
    %94 = arith.maximumf %92, %93 : vector<1x128xf32>
    %95 = vector.broadcast %85 : vector<1x128xf32> to vector<16x128xf32>
    %96 = arith.subf %81, %95 : vector<16x128xf32>
    %cst_38 = arith.constant 9.99999974E-6 : f32
    %97 = vector.broadcast %cst_38 : f32 to vector<1x128xf32>
    %98 = arith.addf %94, %97 : vector<1x128xf32>
    %99 = math.rsqrt %98 : vector<1x128xf32>
    %100 = vector.broadcast %99 : vector<1x128xf32> to vector<16x128xf32>
    %101 = arith.mulf %96, %100 : vector<16x128xf32>
    %cst_39 = arith.constant 0.000000e+00 : f32
    %102 = vector.broadcast %cst_39 : f32 to vector<16x128xf32>
    %103 = arith.maximumf %101, %102 : vector<16x128xf32>
    %104 = arith.truncf %103 : vector<16x128xf32> to vector<16x128xbf16>
    %c0_40 = arith.constant 0 : index
    %c0_41 = arith.constant 0 : index
    %105 = vector.load %arg5[%c0_40, %c0_41] : memref<128x128xbf16, #tpu.memory_space<vmem>>, vector<128x128xbf16>
    %cst_42 = arith.constant dense<0.000000e+00> : vector<16x128xf32>
    %106 = tpu.matmul %104, %105, %cst_42 {dimension_numbers = #tpu.dot_dimension_numbers<[1], [0], [0], [1], [0, 0, 1, 1], [], []>} : vector<16x128xbf16>, vector<128x128xbf16>, vector<16x128xf32> -> vector<16x128xf32>
    %cst_43 = arith.constant dense<0.000000e+00> : vector<128xf32>
    %107 = vector.multi_reduction <add>, %106, %cst_43 [0] : vector<16x128xf32> to vector<128xf32>
    %108 = vector.shape_cast %107 : vector<128xf32> to vector<1x128xf32>
    %cst_44 = arith.constant 1.600000e+01 : f32
    %109 = vector.broadcast %cst_44 : f32 to vector<1x128xf32>
    %110 = arith.divf %108, %109 : vector<1x128xf32>
    %111 = arith.mulf %106, %106 : vector<16x128xf32>
    %cst_45 = arith.constant dense<0.000000e+00> : vector<128xf32>
    %112 = vector.multi_reduction <add>, %111, %cst_45 [0] : vector<16x128xf32> to vector<128xf32>
    %113 = vector.shape_cast %112 : vector<128xf32> to vector<1x128xf32>
    %cst_46 = arith.constant 1.600000e+01 : f32
    %114 = vector.broadcast %cst_46 : f32 to vector<1x128xf32>
    %115 = arith.divf %113, %114 : vector<1x128xf32>
    %116 = arith.mulf %110, %110 : vector<1x128xf32>
    %117 = arith.subf %115, %116 : vector<1x128xf32>
    %cst_47 = arith.constant 0.000000e+00 : f32
    %118 = vector.broadcast %cst_47 : f32 to vector<1x128xf32>
    %119 = arith.maximumf %117, %118 : vector<1x128xf32>
    %120 = vector.broadcast %110 : vector<1x128xf32> to vector<16x128xf32>
    %121 = arith.subf %106, %120 : vector<16x128xf32>
    %cst_48 = arith.constant 9.99999974E-6 : f32
    %122 = vector.broadcast %cst_48 : f32 to vector<1x128xf32>
    %123 = arith.addf %119, %122 : vector<1x128xf32>
    %124 = math.rsqrt %123 : vector<1x128xf32>
    %125 = vector.broadcast %124 : vector<1x128xf32> to vector<16x128xf32>
    %126 = arith.mulf %121, %125 : vector<16x128xf32>
    %127 = arith.addf %126, %79 : vector<16x128xf32>
    %cst_49 = arith.constant 0.000000e+00 : f32
    %128 = vector.broadcast %cst_49 : f32 to vector<16x128xf32>
    %129 = arith.maximumf %127, %128 : vector<16x128xf32>
    %130 = arith.truncf %129 : vector<16x128xf32> to vector<16x128xbf16>
    %131 = arith.extf %130 : vector<16x128xbf16> to vector<16x128xf32>
    %132 = tpu.concatenate %131, %131 in 1 : vector<16x128xf32>, vector<16x128xf32> -> vector<16x256xf32>
    %c0_50 = arith.constant 0 : index
    %c0_51 = arith.constant 0 : index
    %133 = vector.load %arg6[%c0_50, %c0_51] : memref<128x256xbf16, #tpu.memory_space<vmem>>, vector<128x256xbf16>
    %cst_52 = arith.constant dense<0.000000e+00> : vector<16x256xf32>
    %134 = tpu.matmul %130, %133, %cst_52 {dimension_numbers = #tpu.dot_dimension_numbers<[1], [0], [0], [1], [0, 0, 1, 1], [], []>} : vector<16x128xbf16>, vector<128x256xbf16>, vector<16x256xf32> -> vector<16x256xf32>
    %cst_53 = arith.constant dense<0.000000e+00> : vector<256xf32>
    %135 = vector.multi_reduction <add>, %134, %cst_53 [0] : vector<16x256xf32> to vector<256xf32>
    %136 = vector.shape_cast %135 : vector<256xf32> to vector<1x256xf32>
    %cst_54 = arith.constant 1.600000e+01 : f32
    %137 = vector.broadcast %cst_54 : f32 to vector<1x256xf32>
    %138 = arith.divf %136, %137 : vector<1x256xf32>
    %139 = arith.mulf %134, %134 : vector<16x256xf32>
    %cst_55 = arith.constant dense<0.000000e+00> : vector<256xf32>
    %140 = vector.multi_reduction <add>, %139, %cst_55 [0] : vector<16x256xf32> to vector<256xf32>
    %141 = vector.shape_cast %140 : vector<256xf32> to vector<1x256xf32>
    %cst_56 = arith.constant 1.600000e+01 : f32
    %142 = vector.broadcast %cst_56 : f32 to vector<1x256xf32>
    %143 = arith.divf %141, %142 : vector<1x256xf32>
    %144 = arith.mulf %138, %138 : vector<1x256xf32>
    %145 = arith.subf %143, %144 : vector<1x256xf32>
    %cst_57 = arith.constant 0.000000e+00 : f32
    %146 = vector.broadcast %cst_57 : f32 to vector<1x256xf32>
    %147 = arith.maximumf %145, %146 : vector<1x256xf32>
    %148 = vector.broadcast %138 : vector<1x256xf32> to vector<16x256xf32>
    %149 = arith.subf %134, %148 : vector<16x256xf32>
    %cst_58 = arith.constant 9.99999974E-6 : f32
    %150 = vector.broadcast %cst_58 : f32 to vector<1x256xf32>
    %151 = arith.addf %147, %150 : vector<1x256xf32>
    %152 = math.rsqrt %151 : vector<1x256xf32>
    %153 = vector.broadcast %152 : vector<1x256xf32> to vector<16x256xf32>
    %154 = arith.mulf %149, %153 : vector<16x256xf32>
    %cst_59 = arith.constant 0.000000e+00 : f32
    %155 = vector.broadcast %cst_59 : f32 to vector<16x256xf32>
    %156 = arith.maximumf %154, %155 : vector<16x256xf32>
    %157 = arith.truncf %156 : vector<16x256xf32> to vector<16x256xbf16>
    %c0_60 = arith.constant 0 : index
    %c0_61 = arith.constant 0 : index
    %158 = vector.load %arg7[%c0_60, %c0_61] : memref<256x256xbf16, #tpu.memory_space<vmem>>, vector<256x256xbf16>
    %cst_62 = arith.constant dense<0.000000e+00> : vector<16x256xf32>
    %159 = tpu.matmul %157, %158, %cst_62 {dimension_numbers = #tpu.dot_dimension_numbers<[1], [0], [0], [1], [0, 0, 1, 1], [], []>} : vector<16x256xbf16>, vector<256x256xbf16>, vector<16x256xf32> -> vector<16x256xf32>
    %cst_63 = arith.constant dense<0.000000e+00> : vector<256xf32>
    %160 = vector.multi_reduction <add>, %159, %cst_63 [0] : vector<16x256xf32> to vector<256xf32>
    %161 = vector.shape_cast %160 : vector<256xf32> to vector<1x256xf32>
    %cst_64 = arith.constant 1.600000e+01 : f32
    %162 = vector.broadcast %cst_64 : f32 to vector<1x256xf32>
    %163 = arith.divf %161, %162 : vector<1x256xf32>
    %164 = arith.mulf %159, %159 : vector<16x256xf32>
    %cst_65 = arith.constant dense<0.000000e+00> : vector<256xf32>
    %165 = vector.multi_reduction <add>, %164, %cst_65 [0] : vector<16x256xf32> to vector<256xf32>
    %166 = vector.shape_cast %165 : vector<256xf32> to vector<1x256xf32>
    %cst_66 = arith.constant 1.600000e+01 : f32
    %167 = vector.broadcast %cst_66 : f32 to vector<1x256xf32>
    %168 = arith.divf %166, %167 : vector<1x256xf32>
    %169 = arith.mulf %163, %163 : vector<1x256xf32>
    %170 = arith.subf %168, %169 : vector<1x256xf32>
    %cst_67 = arith.constant 0.000000e+00 : f32
    %171 = vector.broadcast %cst_67 : f32 to vector<1x256xf32>
    %172 = arith.maximumf %170, %171 : vector<1x256xf32>
    %173 = vector.broadcast %163 : vector<1x256xf32> to vector<16x256xf32>
    %174 = arith.subf %159, %173 : vector<16x256xf32>
    %cst_68 = arith.constant 9.99999974E-6 : f32
    %175 = vector.broadcast %cst_68 : f32 to vector<1x256xf32>
    %176 = arith.addf %172, %175 : vector<1x256xf32>
    %177 = math.rsqrt %176 : vector<1x256xf32>
    %178 = vector.broadcast %177 : vector<1x256xf32> to vector<16x256xf32>
    %179 = arith.mulf %174, %178 : vector<16x256xf32>
    %180 = arith.addf %179, %132 : vector<16x256xf32>
    %cst_69 = arith.constant 0.000000e+00 : f32
    %181 = vector.broadcast %cst_69 : f32 to vector<16x256xf32>
    %182 = arith.maximumf %180, %181 : vector<16x256xf32>
    %183 = arith.truncf %182 : vector<16x256xf32> to vector<16x256xbf16>
    %184 = arith.extf %183 : vector<16x256xbf16> to vector<16x256xf32>
    %185 = tpu.concatenate %184, %184 in 1 : vector<16x256xf32>, vector<16x256xf32> -> vector<16x512xf32>
    %c0_70 = arith.constant 0 : index
    %c0_71 = arith.constant 0 : index
    %186 = vector.load %arg8[%c0_70, %c0_71] : memref<256x512xbf16, #tpu.memory_space<vmem>>, vector<256x512xbf16>
    %cst_72 = arith.constant dense<0.000000e+00> : vector<16x512xf32>
    %187 = tpu.matmul %183, %186, %cst_72 {dimension_numbers = #tpu.dot_dimension_numbers<[1], [0], [0], [1], [0, 0, 1, 1], [], []>} : vector<16x256xbf16>, vector<256x512xbf16>, vector<16x512xf32> -> vector<16x512xf32>
    %cst_73 = arith.constant dense<0.000000e+00> : vector<512xf32>
    %188 = vector.multi_reduction <add>, %187, %cst_73 [0] : vector<16x512xf32> to vector<512xf32>
    %189 = vector.shape_cast %188 : vector<512xf32> to vector<1x512xf32>
    %cst_74 = arith.constant 1.600000e+01 : f32
    %190 = vector.broadcast %cst_74 : f32 to vector<1x512xf32>
    %191 = arith.divf %189, %190 : vector<1x512xf32>
    %192 = arith.mulf %187, %187 : vector<16x512xf32>
    %cst_75 = arith.constant dense<0.000000e+00> : vector<512xf32>
    %193 = vector.multi_reduction <add>, %192, %cst_75 [0] : vector<16x512xf32> to vector<512xf32>
    %194 = vector.shape_cast %193 : vector<512xf32> to vector<1x512xf32>
    %cst_76 = arith.constant 1.600000e+01 : f32
    %195 = vector.broadcast %cst_76 : f32 to vector<1x512xf32>
    %196 = arith.divf %194, %195 : vector<1x512xf32>
    %197 = arith.mulf %191, %191 : vector<1x512xf32>
    %198 = arith.subf %196, %197 : vector<1x512xf32>
    %cst_77 = arith.constant 0.000000e+00 : f32
    %199 = vector.broadcast %cst_77 : f32 to vector<1x512xf32>
    %200 = arith.maximumf %198, %199 : vector<1x512xf32>
    %201 = vector.broadcast %191 : vector<1x512xf32> to vector<16x512xf32>
    %202 = arith.subf %187, %201 : vector<16x512xf32>
    %cst_78 = arith.constant 9.99999974E-6 : f32
    %203 = vector.broadcast %cst_78 : f32 to vector<1x512xf32>
    %204 = arith.addf %200, %203 : vector<1x512xf32>
    %205 = math.rsqrt %204 : vector<1x512xf32>
    %206 = vector.broadcast %205 : vector<1x512xf32> to vector<16x512xf32>
    %207 = arith.mulf %202, %206 : vector<16x512xf32>
    %cst_79 = arith.constant 0.000000e+00 : f32
    %208 = vector.broadcast %cst_79 : f32 to vector<16x512xf32>
    %209 = arith.maximumf %207, %208 : vector<16x512xf32>
    %210 = arith.truncf %209 : vector<16x512xf32> to vector<16x512xbf16>
    %c0_80 = arith.constant 0 : index
    %c0_81 = arith.constant 0 : index
    %211 = vector.load %arg9[%c0_80, %c0_81] : memref<512x512xbf16, #tpu.memory_space<vmem>>, vector<512x512xbf16>
    %cst_82 = arith.constant dense<0.000000e+00> : vector<16x512xf32>
    %212 = tpu.matmul %210, %211, %cst_82 {dimension_numbers = #tpu.dot_dimension_numbers<[1], [0], [0], [1], [0, 0, 1, 1], [], []>} : vector<16x512xbf16>, vector<512x512xbf16>, vector<16x512xf32> -> vector<16x512xf32>
    %cst_83 = arith.constant dense<0.000000e+00> : vector<512xf32>
    %213 = vector.multi_reduction <add>, %212, %cst_83 [0] : vector<16x512xf32> to vector<512xf32>
    %214 = vector.shape_cast %213 : vector<512xf32> to vector<1x512xf32>
    %cst_84 = arith.constant 1.600000e+01 : f32
    %215 = vector.broadcast %cst_84 : f32 to vector<1x512xf32>
    %216 = arith.divf %214, %215 : vector<1x512xf32>
    %217 = arith.mulf %212, %212 : vector<16x512xf32>
    %cst_85 = arith.constant dense<0.000000e+00> : vector<512xf32>
    %218 = vector.multi_reduction <add>, %217, %cst_85 [0] : vector<16x512xf32> to vector<512xf32>
    %219 = vector.shape_cast %218 : vector<512xf32> to vector<1x512xf32>
    %cst_86 = arith.constant 1.600000e+01 : f32
    %220 = vector.broadcast %cst_86 : f32 to vector<1x512xf32>
    %221 = arith.divf %219, %220 : vector<1x512xf32>
    %222 = arith.mulf %216, %216 : vector<1x512xf32>
    %223 = arith.subf %221, %222 : vector<1x512xf32>
    %cst_87 = arith.constant 0.000000e+00 : f32
    %224 = vector.broadcast %cst_87 : f32 to vector<1x512xf32>
    %225 = arith.maximumf %223, %224 : vector<1x512xf32>
    %226 = vector.broadcast %216 : vector<1x512xf32> to vector<16x512xf32>
    %227 = arith.subf %212, %226 : vector<16x512xf32>
    %cst_88 = arith.constant 9.99999974E-6 : f32
    %228 = vector.broadcast %cst_88 : f32 to vector<1x512xf32>
    %229 = arith.addf %225, %228 : vector<1x512xf32>
    %230 = math.rsqrt %229 : vector<1x512xf32>
    %231 = vector.broadcast %230 : vector<1x512xf32> to vector<16x512xf32>
    %232 = arith.mulf %227, %231 : vector<16x512xf32>
    %233 = arith.addf %232, %185 : vector<16x512xf32>
    %cst_89 = arith.constant 0.000000e+00 : f32
    %234 = vector.broadcast %cst_89 : f32 to vector<16x512xf32>
    %235 = arith.maximumf %233, %234 : vector<16x512xf32>
    %236 = arith.truncf %235 : vector<16x512xf32> to vector<16x512xbf16>
    %237 = arith.extf %236 : vector<16x512xbf16> to vector<16x512xf32>
    %238 = vector.shape_cast %237 : vector<16x512xf32> to vector<2x8x512xf32>
    %cst_90 = arith.constant dense<0.000000e+00> : vector<2x512xf32>
    %239 = vector.multi_reduction <add>, %238, %cst_90 [1] : vector<2x8x512xf32> to vector<2x512xf32>
    %cst_91 = arith.constant 8.000000e+00 : f32
    %240 = vector.broadcast %cst_91 : f32 to vector<2x512xf32>
    %241 = arith.divf %239, %240 : vector<2x512xf32>
    %c0_92 = arith.constant 0 : index
    %c0_93 = arith.constant 0 : index
    %242 = vector.load %arg10[%c0_92, %c0_93] : memref<1x512xf32, #tpu.memory_space<vmem>>, vector<1x512xf32>
    %243 = vector.broadcast %242 : vector<1x512xf32> to vector<2x512xf32>
    %244 = arith.mulf %241, %243 : vector<2x512xf32>
    %cst_94 = arith.constant dense<0.000000e+00> : vector<2xf32>
    %245 = vector.multi_reduction <add>, %244, %cst_94 [1] : vector<2x512xf32> to vector<2xf32>
    %246 = vector.shape_cast %245 : vector<2xf32> to vector<2x1xf32>
    %c0_95 = arith.constant 0 : index
    %c0_96 = arith.constant 0 : index
    %247 = vector.load %arg11[%c0_95, %c0_96] : memref<1x1xf32, #tpu.memory_space<vmem>>, vector<1x1xf32>
    %248 = vector.broadcast %247 : vector<1x1xf32> to vector<2x1xf32>
    %249 = arith.addf %246, %248 : vector<2x1xf32>
    %c0_97 = arith.constant 0 : index
    %c0_98 = arith.constant 0 : index
    %250 = vector.load %arg12[%c0_97, %c0_98] : memref<2x1xf32, #tpu.memory_space<vmem>>, vector<2x1xf32>
    tpu.vector_store %arg12[%c0_97, %c0_98], %249 {strides = array<i32>} : memref<2x1xf32, #tpu.memory_space<vmem>>, vector<2x1xf32>,
    return
  }
}

</mosaic_0001>

<llo_original>
// kernel: model_forward.1
$region0: #{model_forward.1}
  #allocation0 [shape = 'u32[]', space=smem, size = 0x4, offset = 0x4, fixed_abs, tag = 'smem constant byte address 0x4 - core index']
  #allocation1 [shape = 'u32[72,128]{1,0:T(1,128)}', space=vmem, size = 0x9000, scoped, tag = 'internal scratch']
  #allocation2 [shape = 'f32[1,1]{1,0:T(1,128)S(1)}', space=vmem, size = 0x200, scoped, tag = 'scoped memory for model_forward.1']
  %s0 = inlined_call_operand.vmem [shape: bf16[16,16], index: 0, kind: input, shape index: {}]
  %s1 = inlined_call_operand.vmem [shape: bf16[16,64], index: 1, kind: input, shape index: {}]
  %s2 = inlined_call_operand.vmem [shape: bf16[64,64], index: 2, kind: input, shape index: {}]
  %s3 = inlined_call_operand.vmem [shape: bf16[64,64], index: 3, kind: input, shape index: {}]
  %s4 = inlined_call_operand.vmem [shape: bf16[64,128], index: 4, kind: input, shape index: {}]
  %s5 = inlined_call_operand.vmem [shape: bf16[128,128], index: 5, kind: input, shape index: {}]
  %s6 = inlined_call_operand.vmem [shape: bf16[128,256], index: 6, kind: input, shape index: {}]
  %s7 = inlined_call_operand.vmem [shape: bf16[256,256], index: 7, kind: input, shape index: {}]
  %s8 = inlined_call_operand.vmem [shape: bf16[256,512], index: 8, kind: input, shape index: {}]
  %s9 = inlined_call_operand.vmem [shape: bf16[512,512], index: 9, kind: input, shape index: {}]
  %s10 = inlined_call_operand.vmem [shape: f32[1,512], index: 10, kind: input, shape index: {}]
  %s11 = inlined_call_operand.<no memory space> [shape: f32[1,1], index: 11, kind: input, shape index: {}]
  %s12 = inlined_call_operand.vmem [shape: f32[2,1], index: 12, kind: output, shape index: {}]
  %s13 = sld [smem:[#allocation0]]
  $region58: #{model_forward.1} parent=0
    _
  %s15 = ssub.s32 1, %s13
  %s16 = scalar_select 0, %s15, %s13
  %v17 = vstv %s11
  %18 = vst [vmem:[#allocation2] sm:$0x1] %v17
  // Predicated region
  $region2: #{model_forward.1} parent=0 // pred_check
    _
  $region3: #{model_forward.1} parent=0 // pred_check_branch
    %20 = sbr.rel (0) target = $region5
  $region4: #{model_forward.1} parent=0 // pred_region
    _
  $region5: #{model_forward.1} parent=0 // pred_fallthru
    _
  // Predicated region
  $region6: #{model_forward.1} parent=0 // pred_check
    _
  $region7: #{model_forward.1} parent=0 // pred_check_branch
    %22 = sbr.rel (0) target = $region9
  $region8: #{model_forward.1} parent=0 // pred_region
    _
  $region9: #{model_forward.1} parent=0 // pred_fallthru
    _
  // Predicated region
  $region10: #{model_forward.1} parent=0 // pred_check
    _
  $region11: #{model_forward.1} parent=0 // pred_check_branch
    %24 = sbr.rel (0) target = $region13
  $region12: #{model_forward.1} parent=0 // pred_region
    _
  $region13: #{model_forward.1} parent=0 // pred_fallthru
    _
  // Predicated region
  $region14: #{model_forward.1} parent=0 // pred_check
    _
  $region15: #{model_forward.1} parent=0 // pred_check_branch
    %26 = sbr.rel (0) target = $region17
  $region16: #{model_forward.1} parent=0 // pred_region
    _
  $region17: #{model_forward.1} parent=0 // pred_fallthru
    _
  // Predicated region
  $region18: #{model_forward.1} parent=0 // pred_check
    _
  $region19: #{model_forward.1} parent=0 // pred_check_branch
    %28 = sbr.rel (0) target = $region21
  $region20: #{model_forward.1} parent=0 // pred_region
    _
  $region21: #{model_forward.1} parent=0 // pred_fallthru
    _
  // Predicated region
  $region22: #{model_forward.1} parent=0 // pred_check
    _
  $region23: #{model_forward.1} parent=0 // pred_check_branch
    %30 = sbr.rel (0) target = $region25
  $region24: #{model_forward.1} parent=0 // pred_region
    _
  $region25: #{model_forward.1} parent=0 // pred_fallthru
    _
  // Predicated region
  $region26: #{model_forward.1} parent=0 // pred_check
    _
  $region27: #{model_forward.1} parent=0 // pred_check_branch
    %32 = sbr.rel (0) target = $region29
  $region28: #{model_forward.1} parent=0 // pred_region
    _
  $region29: #{model_forward.1} parent=0 // pred_fallthru
    _
  // Predicated region
  $region30: #{model_forward.1} parent=0 // pred_check
    _
  $region31: #{model_forward.1} parent=0 // pred_check_branch
    %34 = sbr.rel (0) target = $region33
  $region32: #{model_forward.1} parent=0 // pred_region
    _
  $region33: #{model_forward.1} parent=0 // pred_fallthru
    _
  // Predicated region
  $region34: #{model_forward.1} parent=0 // pred_check
    _
  $region35: #{model_forward.1} parent=0 // pred_check_branch
    %36 = sbr.rel (0) target = $region37
  $region36: #{model_forward.1} parent=0 // pred_region
    _
  $region37: #{model_forward.1} parent=0 // pred_fallthru
    _
  // Predicated region
  $region38: #{model_forward.1} parent=0 // pred_check
    _
  $region39: #{model_forward.1} parent=0 // pred_check_branch
    %38 = sbr.rel (0) target = $region41
  $region40: #{model_forward.1} parent=0 // pred_region
    _
  $region41: #{model_forward.1} parent=0 // pred_fallthru
    _
  // Predicated region
  $region42: #{model_forward.1} parent=0 // pred_check
    _
  $region43: #{model_forward.1} parent=0 // pred_check_branch
    %40 = sbr.rel (0) target = $region45
  $region44: #{model_forward.1} parent=0 // pred_region
    _
  $region45: #{model_forward.1} parent=0 // pred_fallthru
    _
  // Predicated region
  $region46: #{model_forward.1} parent=0 // pred_check
    _
  $region47: #{model_forward.1} parent=0 // pred_check_branch
    %42 = sbr.rel (0) target = $region49
  $region48: #{model_forward.1} parent=0 // pred_region
    _
  $region49: #{model_forward.1} parent=0 // pred_fallthru
    _
  %v44 = vld [vmem:[%s0] sm:$0xf]
  %v45 = vld [vmem:[%s0 + $0x4] sm:$0xf]
  %v46 = vld [vmem:[%s1] sm:$0xf]
  %v47 = vld [vmem:[%s1 + $0x4] sm:$0xf]
  %v50 = vunpack.c.l.b16 %v44
  %v51 = vunpack.c.l.b16 %v45
  %v52 = vpack.c.b16 %v51, %v50
  %v55 = vunpack.c.l.b16 %v46
  %v56 = vunpack.c.l.b16 %v47
  %v57 = vpack.c.b16 %v56, %v55
  %vm59 = vcmask 130048
  %v61 = vsel %vm59, %v52, 0
  %63 = vmatpush.bf16.msra.mxu0 0
  %64 = vmatpush.bf16.msra.mxu0 0
  %65 = vmatpush.bf16.msra.mxu0 0
  %66 = vmatpush.bf16.msra.mxu0 0
  %67 = vmatpush.bf16.msra.mxu0 0
  %68 = vmatpush.bf16.msra.mxu0 0
  %69 = vmatpush.bf16.msra.mxu0 0
  %70 = vmatpush.bf16.msra.mxu0 %v57
  %71 = vmatmul.bf16.gmra.mxu0 %v61
  %v72 = vpop.f32.mrf.mxu0
  %v73 = vadd.f32 0.0, %v72
  %v74 = vpop.f32.mrf.mxu0
  %v75 = vadd.f32 0.0, %v74
  %76 = vdwg.mxu0
  %vm77 = vcmask 523264
  %v78 = vsel %vm77, %v73, 0.0
  %v79 = vsel %vm77, %v75, 0.0
  %v80 = vadd.f32 %v78, %v79
  %v81 = vrot.slane %v80, 4
  %v82 = vadd.f32 %v80, %v81
  %v83 = vrot.slane %v82, 2
  %v84 = vadd.f32 %v82, %v83
  %v85 = vrot.slane %v84, 1
  %v86 = vadd.f32 %v84, %v85
  %v87 = vrcp.pop 16.0
  %v88 = vmul.f32 16.0, %v87
  %v89 = vsub.f32 1.0, %v88
  %v90 = vmul.f32 %v87, %v89
  %v91 = vadd.f32 %v87, %v90
  %vm92 = vweird.f32 %v87
  %v93 = vsel %vm92, %v87, %v91
  %v94 = vmul.f32 %v86, %v93
  %v95 = vmul.f32 %v73, %v73
  %v96 = vmul.f32 %v75, %v75
  %v97 = vsel %vm77, %v95, 0.0
  %v98 = vsel %vm77, %v96, 0.0
  %v99 = vadd.f32 %v97, %v98
  %v100 = vrot.slane %v99, 4
  %v101 = vadd.f32 %v99, %v100
  %v102 = vrot.slane %v101, 2
  %v103 = vadd.f32 %v101, %v102
  %v104 = vrot.slane %v103, 1
  %v105 = vadd.f32 %v103, %v104
  %v106 = vmul.f32 %v105, %v93
  %v107 = vmul.f32 %v94, %v94
  %v108 = vsub.f32 %v106, %v107
  %v109 = vmax.f32 %v108, 0.0
  %v110 = vsub.f32 %v73, %v94
  %v111 = vsub.f32 %v75, %v94
  %v112 = vadd.f32 %v109, 1e-05
  %v113 = vrsqrt.pop %v112
  %v114 = vmul.f32 %v113, %v112
  %v115 = vmul.f32 %v114, %v113
  %v116 = vmul.f32 0.5, %v115
  %v117 = vsub.f32 1.5, %v116
  %v118 = vmul.f32 %v113, %v117
  %vm119 = vweird.f32 %v112
  %vm120 = vweird.f32 %v113
  %vm121 = vmor %vm119, %vm120
  %v122 = vsel %vm121, %v113, %v118
  %v123 = vmul.f32 %v110, %v122
  %v124 = vmul.f32 %v111, %v122
  %v125 = vmax.f32 %v123, 0.0
  %v126 = vmax.f32 %v124, 0.0
  %v127 = vpack.c.bf16 %v125, %v125
  %v128 = vpack.c.bf16 %v126, %v126
  %v129 = vunpack.c.l.bf16 %v127
  %v130 = vunpack.c.l.bf16 %v128
  %v131 = vld [vmem:[%s2] sm:$0xf]
  %v132 = vld [vmem:[%s2 + $0x4] sm:$0xf]
  %v133 = vld [vmem:[%s2 + $0x8] sm:$0xf]
  %v134 = vld [vmem:[%s2 + $0xc] sm:$0xf]
  %v135 = vld [vmem:[%s2 + $0x10] sm:$0xf]
  %v136 = vld [vmem:[%s2 + $0x14] sm:$0xf]
  %v137 = vld [vmem:[%s2 + $0x18] sm:$0xf]
  %v138 = vld [vmem:[%s2 + $0x1c] sm:$0xf]
  %v141 = vunpack.c.l.b16 %v127
  %v142 = vunpack.c.l.b16 %v128
  %v143 = vpack.c.b16 %v142, %v141
  %v152 = vunpack.c.l.b16 %v131
  %v153 = vunpack.c.l.b16 %v132
  %v154 = vunpack.c.l.b16 %v133
  %v155 = vunpack.c.l.b16 %v134
  %v156 = vunpack.c.l.b16 %v135
  %v157 = vunpack.c.l.b16 %v136
  %v158 = vunpack.c.l.b16 %v137
  %v159 = vunpack.c.l.b16 %v138
  %v160 = vpack.c.b16 %v153, %v152
  %v161 = vpack.c.b16 %v155, %v154
  %v162 = vpack.c.b16 %v157, %v156
  %v163 = vpack.c.b16 %v159, %v158
  %v169 = vsel %vm77, %v143, 0
  %171 = vmatpush.bf16.msra.mxu0 0
  %172 = vmatpush.bf16.msra.mxu0 0
  %173 = vmatpush.bf16.msra.mxu0 0
  %174 = vmatpush.bf16.msra.mxu0 0
  %175 = vmatpush.bf16.msra.mxu0 %v163
  %176 = vmatpush.bf16.msra.mxu0 %v162
  %177 = vmatpush.bf16.msra.mxu0 %v161
  %178 = vmatpush.bf16.msra.mxu0 %v160
  %179 = vmatmul.bf16.gmra.mxu0 %v169
  %v180 = vpop.f32.mrf.mxu0
  %v181 = vadd.f32 0.0, %v180
  %v182 = vpop.f32.mrf.mxu0
  %v183 = vadd.f32 0.0, %v182
  %184 = vdwg.mxu0
  %v185 = vsel %vm77, %v181, 0.0
  %v186 = vsel %vm77, %v183, 0.0
  %v187 = vadd.f32 %v185, %v186
  %v188 = vrot.slane %v187, 4
  %v189 = vadd.f32 %v187, %v188
  %v190 = vrot.slane %v189, 2
  %v191 = vadd.f32 %v189, %v190
  %v192 = vrot.slane %v191, 1
  %v193 = vadd.f32 %v191, %v192
  %v194 = vmul.f32 %v193, %v93
  %v195 = vmul.f32 %v181, %v181
  %v196 = vmul.f32 %v183, %v183
  %v197 = vsel %vm77, %v195, 0.0
  %v198 = vsel %vm77, %v196, 0.0
  %v199 = vadd.f32 %v197, %v198
  %v200 = vrot.slane %v199, 4
  %v201 = vadd.f32 %v199, %v200
  %v202 = vrot.slane %v201, 2
  %v203 = vadd.f32 %v201, %v202
  %v204 = vrot.slane %v203, 1
  %v205 = vadd.f32 %v203, %v204
  %v206 = vmul.f32 %v205, %v93
  %v207 = vmul.f32 %v194, %v194
  %v208 = vsub.f32 %v206, %v207
  %v209 = vmax.f32 %v208, 0.0
  %v210 = vsub.f32 %v181, %v194
  %v211 = vsub.f32 %v183, %v194
  %v212 = vadd.f32 %v209, 1e-05
  %v213 = vrsqrt.pop %v212
  %v214 = vmul.f32 %v213, %v212
  %v215 = vmul.f32 %v214, %v213
  %v216 = vmul.f32 0.5, %v215
  %v217 = vsub.f32 1.5, %v216
  %v218 = vmul.f32 %v213, %v217
  %vm219 = vweird.f32 %v212
  %vm220 = vweird.f32 %v213
  %vm221 = vmor %vm219, %vm220
  %v222 = vsel %vm221, %v213, %v218
  %v223 = vmul.f32 %v210, %v222
  %v224 = vmul.f32 %v211, %v222
  %v225 = vmax.f32 %v223, 0.0
  %v226 = vmax.f32 %v224, 0.0
  %v227 = vpack.c.bf16 %v226, %v225
  %v228 = vld [vmem:[%s3] sm:$0xf]
  %v229 = vld [vmem:[%s3 + $0x4] sm:$0xf]
  %v230 = vld [vmem:[%s3 + $0x8] sm:$0xf]
  %v231 = vld [vmem:[%s3 + $0xc] sm:$0xf]
  %v232 = vld [vmem:[%s3 + $0x10] sm:$0xf]
  %v233 = vld [vmem:[%s3 + $0x14] sm:$0xf]
  %v234 = vld [vmem:[%s3 + $0x18] sm:$0xf]
  %v235 = vld [vmem:[%s3 + $0x1c] sm:$0xf]
  %v244 = vunpack.c.l.b16 %v228
  %v245 = vunpack.c.l.b16 %v229
  %v246 = vunpack.c.l.b16 %v230
  %v247 = vunpack.c.l.b16 %v231
  %v248 = vunpack.c.l.b16 %v232
  %v249 = vunpack.c.l.b16 %v233
  %v250 = vunpack.c.l.b16 %v234
  %v251 = vunpack.c.l.b16 %v235
  %v252 = vpack.c.b16 %v245, %v244
  %v253 = vpack.c.b16 %v247, %v246
  %v254 = vpack.c.b16 %v249, %v248
  %v255 = vpack.c.b16 %v251, %v250
  %v261 = vsel %vm77, %v227, 0
  %263 = vmatpush.bf16.msra.mxu0 0
  %264 = vmatpush.bf16.msra.mxu0 0
  %265 = vmatpush.bf16.msra.mxu0 0
  %266 = vmatpush.bf16.msra.mxu0 0
  %267 = vmatpush.bf16.msra.mxu0 %v255
  %268 = vmatpush.bf16.msra.mxu0 %v254
  %269 = vmatpush.bf16.msra.mxu0 %v253
  %270 = vmatpush.bf16.msra.mxu0 %v252
  %271 = vmatmul.bf16.gmra.mxu0 %v261
  %v272 = vpop.f32.mrf.mxu0
  %v273 = vadd.f32 0.0, %v272
  %v274 = vpop.f32.mrf.mxu0
  %v275 = vadd.f32 0.0, %v274
  %276 = vdwg.mxu0
  %v277 = vsel %vm77, %v273, 0.0
  %v278 = vsel %vm77, %v275, 0.0
  %v279 = vadd.f32 %v277, %v278
  %v280 = vrot.slane %v279, 4
  %v281 = vadd.f32 %v279, %v280
  %v282 = vrot.slane %v281, 2
  %v283 = vadd.f32 %v281, %v282
  %v284 = vrot.slane %v283, 1
  %v285 = vadd.f32 %v283, %v284
  %v286 = vmul.f32 %v285, %v93
  %v287 = vmul.f32 %v273, %v273
  %v288 = vmul.f32 %v275, %v275
  %v289 = vsel %vm77, %v287, 0.0
  %v290 = vsel %vm77, %v288, 0.0
  %v291 = vadd.f32 %v289, %v290
  %v292 = vrot.slane %v291, 4
  %v293 = vadd.f32 %v291, %v292
  %v294 = vrot.slane %v293, 2
  %v295 = vadd.f32 %v293, %v294
  %v296 = vrot.slane %v295, 1
  %v297 = vadd.f32 %v295, %v296
  %v298 = vmul.f32 %v297, %v93
  %v299 = vmul.f32 %v286, %v286
  %v300 = vsub.f32 %v298, %v299
  %v301 = vmax.f32 %v300, 0.0
  %v302 = vsub.f32 %v273, %v286
  %v303 = vsub.f32 %v275, %v286
  %v304 = vadd.f32 %v301, 1e-05
  %v305 = vrsqrt.pop %v304
  %v306 = vmul.f32 %v305, %v304
  %v307 = vmul.f32 %v306, %v305
  %v308 = vmul.f32 0.5, %v307
  %v309 = vsub.f32 1.5, %v308
  %v310 = vmul.f32 %v305, %v309
  %vm311 = vweird.f32 %v304
  %vm312 = vweird.f32 %v305
  %vm313 = vmor %vm311, %vm312
  %v314 = vsel %vm313, %v305, %v310
  %v315 = vmul.f32 %v302, %v314
  %v316 = vmul.f32 %v303, %v314
  %v317 = vadd.f32 %v315, %v129
  %v318 = vadd.f32 %v316, %v130
  %v319 = vmax.f32 %v317, 0.0
  %v320 = vmax.f32 %v318, 0.0
  %v321 = vpack.c.bf16 %v319, %v319
  %v322 = vpack.c.bf16 %v320, %v320
  %v323 = vunpack.c.l.bf16 %v321
  %v324 = vunpack.c.l.bf16 %v322
  %327 = vrot.lane.b32.xlu0 %v323, 64
  %v328 = vpop.permute.xlu0 %327
  %329 = vrot.lane.b32.xlu0 %v324, 64
  %v330 = vpop.permute.xlu0 %329
  %v333 = vsel %vm77, %v323, %v328
  %v334 = vsel %vm77, %v324, %v330
  %v335 = vld [vmem:[%s4] sm:$0xf]
  %v336 = vld [vmem:[%s4 + $0x4] sm:$0xf]
  %v337 = vld [vmem:[%s4 + $0x8] sm:$0xf]
  %v338 = vld [vmem:[%s4 + $0xc] sm:$0xf]
  %v339 = vld [vmem:[%s4 + $0x10] sm:$0xf]
  %v340 = vld [vmem:[%s4 + $0x14] sm:$0xf]
  %v341 = vld [vmem:[%s4 + $0x18] sm:$0xf]
  %v342 = vld [vmem:[%s4 + $0x1c] sm:$0xf]
  %v345 = vunpack.c.l.b16 %v321
  %v346 = vunpack.c.l.b16 %v322
  %v347 = vpack.c.b16 %v346, %v345
  %v356 = vunpack.c.l.b16 %v335
  %v357 = vunpack.c.l.b16 %v336
  %v358 = vunpack.c.l.b16 %v337
  %v359 = vunpack.c.l.b16 %v338
  %v360 = vunpack.c.l.b16 %v339
  %v361 = vunpack.c.l.b16 %v340
  %v362 = vunpack.c.l.b16 %v341
  %v363 = vunpack.c.l.b16 %v342
  %v364 = vpack.c.b16 %v357, %v356
  %v365 = vpack.c.b16 %v359, %v358
  %v366 = vpack.c.b16 %v361, %v360
  %v367 = vpack.c.b16 %v363, %v362
  %v373 = vsel %vm77, %v347, 0
  %375 = vmatpush.bf16.msra.mxu0 0
  %376 = vmatpush.bf16.msra.mxu0 0
  %377 = vmatpush.bf16.msra.mxu0 0
  %378 = vmatpush.bf16.msra.mxu0 0
  %379 = vmatpush.bf16.msra.mxu0 %v367
  %380 = vmatpush.bf16.msra.mxu0 %v366
  %381 = vmatpush.bf16.msra.mxu0 %v365
  %382 = vmatpush.bf16.msra.mxu0 %v364
  %383 = vmatmul.bf16.gmra.mxu0 %v373
  %v384 = vpop.f32.mrf.mxu0
  %v385 = vadd.f32 0.0, %v384
  %v386 = vpop.f32.mrf.mxu0
  %v387 = vadd.f32 0.0, %v386
  %388 = vdwg.mxu0
  %v389 = vadd.f32 %v385, %v387
  %v390 = vrot.slane %v389, 4
  %v391 = vadd.f32 %v389, %v390
  %v392 = vrot.slane %v391, 2
  %v393 = vadd.f32 %v391, %v392
  %v394 = vrot.slane %v393, 1
  %v395 = vadd.f32 %v393, %v394
  %v396 = vmul.f32 %v395, %v93
  %v397 = vmul.f32 %v385, %v385
  %v398 = vmul.f32 %v387, %v387
  %v399 = vadd.f32 %v397, %v398
  %v400 = vrot.slane %v399, 4
  %v401 = vadd.f32 %v399, %v400
  %v402 = vrot.slane %v401, 2
  %v403 = vadd.f32 %v401, %v402
  %v404 = vrot.slane %v403, 1
  %v405 = vadd.f32 %v403, %v404
  %v406 = vmul.f32 %v405, %v93
  %v407 = vmul.f32 %v396, %v396
  %v408 = vsub.f32 %v406, %v407
  %v409 = vmax.f32 %v408, 0.0
  %v410 = vsub.f32 %v385, %v396
  %v411 = vsub.f32 %v387, %v396
  %v412 = vadd.f32 %v409, 1e-05
  %v413 = vrsqrt.pop %v412
  %v414 = vmul.f32 %v413, %v412
  %v415 = vmul.f32 %v414, %v413
  %v416 = vmul.f32 0.5, %v415
  %v417 = vsub.f32 1.5, %v416
  %v418 = vmul.f32 %v413, %v417
  %vm419 = vweird.f32 %v412
  %vm420 = vweird.f32 %v413
  %vm421 = vmor %vm419, %vm420
  %v422 = vsel %vm421, %v413, %v418
  %v423 = vmul.f32 %v410, %v422
  %v424 = vmul.f32 %v411, %v422
  %v425 = vmax.f32 %v423, 0.0
  %v426 = vmax.f32 %v424, 0.0
  %v427 = vpack.c.bf16 %v426, %v425
  %v428 = vld [vmem:[%s5] sm:$0xf]
  %v429 = vld [vmem:[%s5 + $0x4] sm:$0xf]
  %v430 = vld [vmem:[%s5 + $0x8] sm:$0xf]
  %v431 = vld [vmem:[%s5 + $0xc] sm:$0xf]
  %v432 = vld [vmem:[%s5 + $0x10] sm:$0xf]
  %v433 = vld [vmem:[%s5 + $0x14] sm:$0xf]
  %v434 = vld [vmem:[%s5 + $0x18] sm:$0xf]
  %v435 = vld [vmem:[%s5 + $0x1c] sm:$0xf]
  %v436 = vld [vmem:[%s5 + $0x20] sm:$0xf]
  %v437 = vld [vmem:[%s5 + $0x24] sm:$0xf]
  %v438 = vld [vmem:[%s5 + $0x28] sm:$0xf]
  %v439 = vld [vmem:[%s5 + $0x2c] sm:$0xf]
  %v440 = vld [vmem:[%s5 + $0x30] sm:$0xf]
  %v441 = vld [vmem:[%s5 + $0x34] sm:$0xf]
  %v442 = vld [vmem:[%s5 + $0x38] sm:$0xf]
  %v443 = vld [vmem:[%s5 + $0x3c] sm:$0xf]
  %v460 = vunpack.c.l.b16 %v428
  %v461 = vunpack.c.l.b16 %v429
  %v462 = vunpack.c.l.b16 %v430
  %v463 = vunpack.c.l.b16 %v431
  %v464 = vunpack.c.l.b16 %v432
  %v465 = vunpack.c.l.b16 %v433
  %v466 = vunpack.c.l.b16 %v434
  %v467 = vunpack.c.l.b16 %v435
  %v468 = vunpack.c.l.b16 %v436
  %v469 = vunpack.c.l.b16 %v437
  %v470 = vunpack.c.l.b16 %v438
  %v471 = vunpack.c.l.b16 %v439
  %v472 = vunpack.c.l.b16 %v440
  %v473 = vunpack.c.l.b16 %v441
  %v474 = vunpack.c.l.b16 %v442
  %v475 = vunpack.c.l.b16 %v443
  %v476 = vpack.c.b16 %v461, %v460
  %v477 = vpack.c.b16 %v463, %v462
  %v478 = vpack.c.b16 %v465, %v464
  %v479 = vpack.c.b16 %v467, %v466
  %v480 = vpack.c.b16 %v469, %v468
  %v481 = vpack.c.b16 %v471, %v470
  %v482 = vpack.c.b16 %v473, %v472
  %v483 = vpack.c.b16 %v475, %v474
  %492 = vmatpush.bf16.msra.mxu0 %v483
  %493 = vmatpush.bf16.msra.mxu0 %v482
  %494 = vmatpush.bf16.msra.mxu0 %v481
  %495 = vmatpush.bf16.msra.mxu0 %v480
  %496 = vmatpush.bf16.msra.mxu0 %v479
  %497 = vmatpush.bf16.msra.mxu0 %v478
  %498 = vmatpush.bf16.msra.mxu0 %v477
  %499 = vmatpush.bf16.msra.mxu0 %v476
  %500 = vmatmul.bf16.gmra.mxu0 %v427
  %v501 = vpop.f32.mrf.mxu0
  %v502 = vadd.f32 0.0, %v501
  %v503 = vpop.f32.mrf.mxu0
  %v504 = vadd.f32 0.0, %v503
  %505 = vdwg.mxu0
  %v506 = vadd.f32 %v502, %v504
  %v507 = vrot.slane %v506, 4
  %v508 = vadd.f32 %v506, %v507
  %v509 = vrot.slane %v508, 2
  %v510 = vadd.f32 %v508, %v509
  %v511 = vrot.slane %v510, 1
  %v512 = vadd.f32 %v510, %v511
  %v513 = vmul.f32 %v512, %v93
  %v514 = vmul.f32 %v502, %v502
  %v515 = vmul.f32 %v504, %v504
  %v516 = vadd.f32 %v514, %v515
  %v517 = vrot.slane %v516, 4
  %v518 = vadd.f32 %v516, %v517
  %v519 = vrot.slane %v518, 2
  %v520 = vadd.f32 %v518, %v519
  %v521 = vrot.slane %v520, 1
  %v522 = vadd.f32 %v520, %v521
  %v523 = vmul.f32 %v522, %v93
  %v524 = vmul.f32 %v513, %v513
  %v525 = vsub.f32 %v523, %v524
  %v526 = vmax.f32 %v525, 0.0
  %v527 = vsub.f32 %v502, %v513
  %v528 = vsub.f32 %v504, %v513
  %v529 = vadd.f32 %v526, 1e-05
  %v530 = vrsqrt.pop %v529
  %v531 = vmul.f32 %v530, %v529
  %v532 = vmul.f32 %v531, %v530
  %v533 = vmul.f32 0.5, %v532
  %v534 = vsub.f32 1.5, %v533
  %v535 = vmul.f32 %v530, %v534
  %vm536 = vweird.f32 %v529
  %vm537 = vweird.f32 %v530
  %vm538 = vmor %vm536, %vm537
  %v539 = vsel %vm538, %v530, %v535
  %v540 = vmul.f32 %v527, %v539
  %v541 = vmul.f32 %v528, %v539
  %v542 = vadd.f32 %v540, %v333
  %v543 = vadd.f32 %v541, %v334
  %v544 = vmax.f32 %v542, 0.0
  %v545 = vmax.f32 %v543, 0.0
  %v546 = vpack.c.bf16 %v544, %v544
  %v547 = vpack.c.bf16 %v545, %v545
  %v548 = vunpack.c.l.bf16 %v546
  %v549 = vunpack.c.l.bf16 %v547
  %v550 = vld [vmem:[%s6] sm:$0xff]
  %v551 = vld [vmem:[%s6 + $0x8] sm:$0xff]
  %v552 = vld [vmem:[%s6 + $0x10] sm:$0xff]
  %v553 = vld [vmem:[%s6 + $0x18] sm:$0xff]
  %v554 = vld [vmem:[%s6 + $0x20] sm:$0xff]
  %v555 = vld [vmem:[%s6 + $0x28] sm:$0xff]
  %v556 = vld [vmem:[%s6 + $0x30] sm:$0xff]
  %v557 = vld [vmem:[%s6 + $0x38] sm:$0xff]
  %v558 = vld [vmem:[%s6 + $0x40] sm:$0xff]
  %v559 = vld [vmem:[%s6 + $0x48] sm:$0xff]
  %v560 = vld [vmem:[%s6 + $0x50] sm:$0xff]
  %v561 = vld [vmem:[%s6 + $0x58] sm:$0xff]
  %v562 = vld [vmem:[%s6 + $0x60] sm:$0xff]
  %v563 = vld [vmem:[%s6 + $0x68] sm:$0xff]
  %v564 = vld [vmem:[%s6 + $0x70] sm:$0xff]
  %v565 = vld [vmem:[%s6 + $0x78] sm:$0xff]
  %v568 = vunpack.c.l.b16 %v546
  %v569 = vunpack.c.l.b16 %v547
  %v570 = vpack.c.b16 %v569, %v568
  %v588 = vunpack.c.l.b16 %v550
  %v589 = vunpack.c.h.b16 %v550
  %v590 = vunpack.c.l.b16 %v551
  %v591 = vunpack.c.h.b16 %v551
  %v592 = vunpack.c.l.b16 %v552
  %v593 = vunpack.c.h.b16 %v552
  %v594 = vunpack.c.l.b16 %v553
  %v595 = vunpack.c.h.b16 %v553
  %v596 = vunpack.c.l.b16 %v554
  %v597 = vunpack.c.h.b16 %v554
  %v598 = vunpack.c.l.b16 %v555
  %v599 = vunpack.c.h.b16 %v555
  %v600 = vunpack.c.l.b16 %v556
  %v601 = vunpack.c.h.b16 %v556
  %v602 = vunpack.c.l.b16 %v557
  %v603 = vunpack.c.h.b16 %v557
  %v604 = vunpack.c.l.b16 %v558
  %v605 = vunpack.c.h.b16 %v558
  %v606 = vunpack.c.l.b16 %v559
  %v607 = vunpack.c.h.b16 %v559
  %v608 = vunpack.c.l.b16 %v560
  %v609 = vunpack.c.h.b16 %v560
  %v610 = vunpack.c.l.b16 %v561
  %v611 = vunpack.c.h.b16 %v561
  %v612 = vunpack.c.l.b16 %v562
  %v613 = vunpack.c.h.b16 %v562
  %v614 = vunpack.c.l.b16 %v563
  %v615 = vunpack.c.h.b16 %v563
  %v616 = vunpack.c.l.b16 %v564
  %v617 = vunpack.c.h.b16 %v564
  %v618 = vunpack.c.l.b16 %v565
  %v619 = vunpack.c.h.b16 %v565
  %v620 = vpack.c.b16 %v590, %v588
  %v621 = vpack.c.b16 %v591, %v589
  %v622 = vpack.c.b16 %v594, %v592
  %v623 = vpack.c.b16 %v595, %v593
  %v624 = vpack.c.b16 %v598, %v596
  %v625 = vpack.c.b16 %v599, %v597
  %v626 = vpack.c.b16 %v602, %v600
  %v627 = vpack.c.b16 %v603, %v601
  %v628 = vpack.c.b16 %v606, %v604
  %v629 = vpack.c.b16 %v607, %v605
  %v630 = vpack.c.b16 %v610, %v608
  %v631 = vpack.c.b16 %v611, %v609
  %v632 = vpack.c.b16 %v614, %v612
  %v633 = vpack.c.b16 %v615, %v613
  %v634 = vpack.c.b16 %v618, %v616
  %v635 = vpack.c.b16 %v619, %v617
  %652 = vmatpush.bf16.msra.mxu0 %v634
  %653 = vmatpush.bf16.msra.mxu0 %v632
  %654 = vmatpush.bf16.msra.mxu0 %v630
  %655 = vmatpush.bf16.msra.mxu0 %v628
  %656 = vmatpush.bf16.msra.mxu0 %v626
  %657 = vmatpush.bf16.msra.mxu0 %v624
  %658 = vmatpush.bf16.msra.mxu0 %v622
  %659 = vmatpush.bf16.msra.mxu0 %v620
  %660 = vmatmul.bf16.gmra.mxu0 %v570
  %v661 = vpop.f32.mrf.mxu0
  %v662 = vadd.f32 0.0, %v661
  %v663 = vpop.f32.mrf.mxu0
  %v664 = vadd.f32 0.0, %v663
  %665 = vdwg.mxu0
  %666 = vmatpush.bf16.msra.mxu0 %v635
  %667 = vmatpush.bf16.msra.mxu0 %v633
  %668 = vmatpush.bf16.msra.mxu0 %v631
  %669 = vmatpush.bf16.msra.mxu0 %v629
  %670 = vmatpush.bf16.msra.mxu0 %v627
  %671 = vmatpush.bf16.msra.mxu0 %v625
  %672 = vmatpush.bf16.msra.mxu0 %v623
  %673 = vmatpush.bf16.msra.mxu0 %v621
  %674 = vmatmul.bf16.gmra.mxu0 %v570
  %v675 = vpop.f32.mrf.mxu0
  %v676 = vadd.f32 0.0, %v675
  %v677 = vpop.f32.mrf.mxu0
  %v678 = vadd.f32 0.0, %v677
  %679 = vdwg.mxu0
  %v680 = vadd.f32 %v662, %v664
  %v681 = vrot.slane %v680, 4
  %v682 = vadd.f32 %v680, %v681
  %v683 = vrot.slane %v682, 2
  %v684 = vadd.f32 %v682, %v683
  %v685 = vrot.slane %v684, 1
  %v686 = vadd.f32 %v684, %v685
  %v687 = vadd.f32 %v676, %v678
  %v688 = vrot.slane %v687, 4
  %v689 = vadd.f32 %v687, %v688
  %v690 = vrot.slane %v689, 2
  %v691 = vadd.f32 %v689, %v690
  %v692 = vrot.slane %v691, 1
  %v693 = vadd.f32 %v691, %v692
  %v694 = vmul.f32 %v686, %v93
  %v695 = vmul.f32 %v693, %v93
  %v696 = vmul.f32 %v662, %v662
  %v697 = vmul.f32 %v676, %v676
  %v698 = vmul.f32 %v664, %v664
  %v699 = vmul.f32 %v678, %v678
  %v700 = vadd.f32 %v696, %v698
  %v701 = vrot.slane %v700, 4
  %v702 = vadd.f32 %v700, %v701
  %v703 = vrot.slane %v702, 2
  %v704 = vadd.f32 %v702, %v703
  %v705 = vrot.slane %v704, 1
  %v706 = vadd.f32 %v704, %v705
  %v707 = vadd.f32 %v697, %v699
  %v708 = vrot.slane %v707, 4
  %v709 = vadd.f32 %v707, %v708
  %v710 = vrot.slane %v709, 2
  %v711 = vadd.f32 %v709, %v710
  %v712 = vrot.slane %v711, 1
  %v713 = vadd.f32 %v711, %v712
  %v714 = vmul.f32 %v706, %v93
  %v715 = vmul.f32 %v713, %v93
  %v716 = vmul.f32 %v694, %v694
  %v717 = vmul.f32 %v695, %v695
  %v718 = vsub.f32 %v714, %v716
  %v719 = vsub.f32 %v715, %v717
  %v720 = vmax.f32 %v718, 0.0
  %v721 = vmax.f32 %v719, 0.0
  %v722 = vsub.f32 %v662, %v694
  %v723 = vsub.f32 %v676, %v695
  %v724 = vsub.f32 %v664, %v694
  %v725 = vsub.f32 %v678, %v695
  %v726 = vadd.f32 %v720, 1e-05
  %v727 = vadd.f32 %v721, 1e-05
  %v728 = vrsqrt.pop %v726
  %v729 = vmul.f32 %v728, %v726
  %v730 = vmul.f32 %v729, %v728
  %v731 = vmul.f32 0.5, %v730
  %v732 = vsub.f32 1.5, %v731
  %v733 = vmul.f32 %v728, %v732
  %vm734 = vweird.f32 %v726
  %vm735 = vweird.f32 %v728
  %vm736 = vmor %vm734, %vm735
  %v737 = vsel %vm736, %v728, %v733
  %v738 = vrsqrt.pop %v727
  %v739 = vmul.f32 %v738, %v727
  %v740 = vmul.f32 %v739, %v738
  %v741 = vmul.f32 0.5, %v740
  %v742 = vsub.f32 1.5, %v741
  %v743 = vmul.f32 %v738, %v742
  %vm744 = vweird.f32 %v727
  %vm745 = vweird.f32 %v738
  %vm746 = vmor %vm744, %vm745
  %v747 = vsel %vm746, %v738, %v743
  %v748 = vmul.f32 %v722, %v737
  %v749 = vmul.f32 %v723, %v747
  %v750 = vmul.f32 %v724, %v737
  %v751 = vmul.f32 %v725, %v747
  %v752 = vmax.f32 %v748, 0.0
  %v753 = vmax.f32 %v749, 0.0
  %v754 = vmax.f32 %v750, 0.0
  %v755 = vmax.f32 %v751, 0.0
  %v756 = vpack.c.bf16 %v754, %v752
  %v757 = vpack.c.bf16 %v755, %v753
  %v758 = vld [vmem:[%s7] sm:$0xff]
  %v759 = vld [vmem:[%s7 + $0x8] sm:$0xff]
  %v760 = vld [vmem:[%s7 + $0x10] sm:$0xff]
  %v761 = vld [vmem:[%s7 + $0x18] sm:$0xff]
  %v762 = vld [vmem:[%s7 + $0x20] sm:$0xff]
  %v763 = vld [vmem:[%s7 + $0x28] sm:$0xff]
  %v764 = vld [vmem:[%s7 + $0x30] sm:$0xff]
  %v765 = vld [vmem:[%s7 + $0x38] sm:$0xff]
  %v766 = vld [vmem:[%s7 + $0x40] sm:$0xff]
  %v767 = vld [vmem:[%s7 + $0x48] sm:$0xff]
  %v768 = vld [vmem:[%s7 + $0x50] sm:$0xff]
  %v769 = vld [vmem:[%s7 + $0x58] sm:$0xff]
  %v770 = vld [vmem:[%s7 + $0x60] sm:$0xff]
  %v771 = vld [vmem:[%s7 + $0x68] sm:$0xff]
  %v772 = vld [vmem:[%s7 + $0x70] sm:$0xff]
  %v773 = vld [vmem:[%s7 + $0x78] sm:$0xff]
  %v774 = vld [vmem:[%s7 + $0x80] sm:$0xff]
  %v775 = vld [vmem:[%s7 + $0x88] sm:$0xff]
  %v776 = vld [vmem:[%s7 + $0x90] sm:$0xff]
  %v777 = vld [vmem:[%s7 + $0x98] sm:$0xff]
  %v778 = vld [vmem:[%s7 + $0xa0] sm:$0xff]
  %v779 = vld [vmem:[%s7 + $0xa8] sm:$0xff]
  %v780 = vld [vmem:[%s7 + $0xb0] sm:$0xff]
  %v781 = vld [vmem:[%s7 + $0xb8] sm:$0xff]
  %v782 = vld [vmem:[%s7 + $0xc0] sm:$0xff]
  %v783 = vld [vmem:[%s7 + $0xc8] sm:$0xff]
  %v784 = vld [vmem:[%s7 + $0xd0] sm:$0xff]
  %v785 = vld [vmem:[%s7 + $0xd8] sm:$0xff]
  %v786 = vld [vmem:[%s7 + $0xe0] sm:$0xff]
  %v787 = vld [vmem:[%s7 + $0xe8] sm:$0xff]
  %v788 = vld [vmem:[%s7 + $0xf0] sm:$0xff]
  %v789 = vld [vmem:[%s7 + $0xf8] sm:$0xff]
  %v822 = vunpack.c.l.b16 %v758
  %v823 = vunpack.c.h.b16 %v758
  %v824 = vunpack.c.l.b16 %v759
  %v825 = vunpack.c.h.b16 %v759
  %v826 = vunpack.c.l.b16 %v760
  %v827 = vunpack.c.h.b16 %v760
  %v828 = vunpack.c.l.b16 %v761
  %v829 = vunpack.c.h.b16 %v761
  %v830 = vunpack.c.l.b16 %v762
  %v831 = vunpack.c.h.b16 %v762
  %v832 = vunpack.c.l.b16 %v763
  %v833 = vunpack.c.h.b16 %v763
  %v834 = vunpack.c.l.b16 %v764
  %v835 = vunpack.c.h.b16 %v764
  %v836 = vunpack.c.l.b16 %v765
  %v837 = vunpack.c.h.b16 %v765
  %v838 = vunpack.c.l.b16 %v766
  %v839 = vunpack.c.h.b16 %v766
  %v840 = vunpack.c.l.b16 %v767
  %v841 = vunpack.c.h.b16 %v767
  %v842 = vunpack.c.l.b16 %v768
  %v843 = vunpack.c.h.b16 %v768
  %v844 = vunpack.c.l.b16 %v769
  %v845 = vunpack.c.h.b16 %v769
  %v846 = vunpack.c.l.b16 %v770
  %v847 = vunpack.c.h.b16 %v770
  %v848 = vunpack.c.l.b16 %v771
  %v849 = vunpack.c.h.b16 %v771
  %v850 = vunpack.c.l.b16 %v772
  %v851 = vunpack.c.h.b16 %v772
  %v852 = vunpack.c.l.b16 %v773
  %v853 = vunpack.c.h.b16 %v773
  %v854 = vunpack.c.l.b16 %v774
  %v855 = vunpack.c.h.b16 %v774
  %v856 = vunpack.c.l.b16 %v775
  %v857 = vunpack.c.h.b16 %v775
  %v858 = vunpack.c.l.b16 %v776
  %v859 = vunpack.c.h.b16 %v776
  %v860 = vunpack.c.l.b16 %v777
  %v861 = vunpack.c.h.b16 %v777
  %v862 = vunpack.c.l.b16 %v778
  %v863 = vunpack.c.h.b16 %v778
  %v864 = vunpack.c.l.b16 %v779
  %v865 = vunpack.c.h.b16 %v779
  %v866 = vunpack.c.l.b16 %v780
  %v867 = vunpack.c.h.b16 %v780
  %v868 = vunpack.c.l.b16 %v781
  %v869 = vunpack.c.h.b16 %v781
  %v870 = vunpack.c.l.b16 %v782
  %v871 = vunpack.c.h.b16 %v782
  %v872 = vunpack.c.l.b16 %v783
  %v873 = vunpack.c.h.b16 %v783
  %v874 = vunpack.c.l.b16 %v784
  %v875 = vunpack.c.h.b16 %v784
  %v876 = vunpack.c.l.b16 %v785
  %v877 = vunpack.c.h.b16 %v785
  %v878 = vunpack.c.l.b16 %v786
  %v879 = vunpack.c.h.b16 %v786
  %v880 = vunpack.c.l.b16 %v787
  %v881 = vunpack.c.h.b16 %v787
  %v882 = vunpack.c.l.b16 %v788
  %v883 = vunpack.c.h.b16 %v788
  %v884 = vunpack.c.l.b16 %v789
  %v885 = vunpack.c.h.b16 %v789
  %v886 = vpack.c.b16 %v824, %v822
  %v887 = vpack.c.b16 %v825, %v823
  %v888 = vpack.c.b16 %v828, %v826
  %v889 = vpack.c.b16 %v829, %v827
  %v890 = vpack.c.b16 %v832, %v830
  %v891 = vpack.c.b16 %v833, %v831
  %v892 = vpack.c.b16 %v836, %v834
  %v893 = vpack.c.b16 %v837, %v835
  %v894 = vpack.c.b16 %v840, %v838
  %v895 = vpack.c.b16 %v841, %v839
  %v896 = vpack.c.b16 %v844, %v842
  %v897 = vpack.c.b16 %v845, %v843
  %v898 = vpack.c.b16 %v848, %v846
  %v899 = vpack.c.b16 %v849, %v847
  %v900 = vpack.c.b16 %v852, %v850
  %v901 = vpack.c.b16 %v853, %v851
  %v902 = vpack.c.b16 %v856, %v854
  %v903 = vpack.c.b16 %v857, %v855
  %v904 = vpack.c.b16 %v860, %v858
  %v905 = vpack.c.b16 %v861, %v859
  %v906 = vpack.c.b16 %v864, %v862
  %v907 = vpack.c.b16 %v865, %v863
  %v908 = vpack.c.b16 %v868, %v866
  %v909 = vpack.c.b16 %v869, %v867
  %v910 = vpack.c.b16 %v872, %v870
  %v911 = vpack.c.b16 %v873, %v871
  %v912 = vpack.c.b16 %v876, %v874
  %v913 = vpack.c.b16 %v877, %v875
  %v914 = vpack.c.b16 %v880, %v878
  %v915 = vpack.c.b16 %v881, %v879
  %v916 = vpack.c.b16 %v884, %v882
  %v917 = vpack.c.b16 %v885, %v883
  %950 = vmatpush.bf16.msra.mxu0 %v900
  %951 = vmatpush.bf16.msra.mxu0 %v898
  %952 = vmatpush.bf16.msra.mxu0 %v896
  %953 = vmatpush.bf16.msra.mxu0 %v894
  %954 = vmatpush.bf16.msra.mxu0 %v892
  %955 = vmatpush.bf16.msra.mxu0 %v890
  %956 = vmatpush.bf16.msra.mxu0 %v888
  %957 = vmatpush.bf16.msra.mxu0 %v886
  %958 = vmatmul.bf16.gmra.mxu0 %v756
  %v959 = vpop.f32.mrf.mxu0
  %v960 = vadd.f32 0.0, %v959
  %v961 = vpop.f32.mrf.mxu0
  %v962 = vadd.f32 0.0, %v961
  %963 = vdwg.mxu0
  %964 = vmatpush.bf16.msra.mxu0 %v916
  %965 = vmatpush.bf16.msra.mxu0 %v914
  %966 = vmatpush.bf16.msra.mxu0 %v912
  %967 = vmatpush.bf16.msra.mxu0 %v910
  %968 = vmatpush.bf16.msra.mxu0 %v908
  %969 = vmatpush.bf16.msra.mxu0 %v906
  %970 = vmatpush.bf16.msra.mxu0 %v904
  %971 = vmatpush.bf16.msra.mxu0 %v902
  %972 = vmatmul.bf16.gmra.mxu0 %v757
  %v973 = vpop.f32.mrf.mxu0
  %v974 = vadd.f32 %v960, %v973
  %v975 = vpop.f32.mrf.mxu0
  %v976 = vadd.f32 %v962, %v975
  %977 = vdwg.mxu0
  %978 = vmatpush.bf16.msra.mxu0 %v901
  %979 = vmatpush.bf16.msra.mxu0 %v899
  %980 = vmatpush.bf16.msra.mxu0 %v897
  %981 = vmatpush.bf16.msra.mxu0 %v895
  %982 = vmatpush.bf16.msra.mxu0 %v893
  %983 = vmatpush.bf16.msra.mxu0 %v891
  %984 = vmatpush.bf16.msra.mxu0 %v889
  %985 = vmatpush.bf16.msra.mxu0 %v887
  %986 = vmatmul.bf16.gmra.mxu0 %v756
  %v987 = vpop.f32.mrf.mxu0
  %v988 = vadd.f32 0.0, %v987
  %v989 = vpop.f32.mrf.mxu0
  %v990 = vadd.f32 0.0, %v989
  %991 = vdwg.mxu0
  %992 = vmatpush.bf16.msra.mxu0 %v917
  %993 = vmatpush.bf16.msra.mxu0 %v915
  %994 = vmatpush.bf16.msra.mxu0 %v913
  %995 = vmatpush.bf16.msra.mxu0 %v911
  %996 = vmatpush.bf16.msra.mxu0 %v909
  %997 = vmatpush.bf16.msra.mxu0 %v907
  %998 = vmatpush.bf16.msra.mxu0 %v905
  %999 = vmatpush.bf16.msra.mxu0 %v903
  %1000 = vmatmul.bf16.gmra.mxu0 %v757
  %v1001 = vpop.f32.mrf.mxu0
  %v1002 = vadd.f32 %v988, %v1001
  %v1003 = vpop.f32.mrf.mxu0
  %v1004 = vadd.f32 %v990, %v1003
  %1005 = vdwg.mxu0
  %v1006 = vadd.f32 %v974, %v976
  %v1007 = vrot.slane %v1006, 4
  %v1008 = vadd.f32 %v1006, %v1007
  %v1009 = vrot.slane %v1008, 2
  %v1010 = vadd.f32 %v1008, %v1009
  %v1011 = vrot.slane %v1010, 1
  %v1012 = vadd.f32 %v1010, %v1011
  %v1013 = vadd.f32 %v1002, %v1004
  %v1014 = vrot.slane %v1013, 4
  %v1015 = vadd.f32 %v1013, %v1014
  %v1016 = vrot.slane %v1015, 2
  %v1017 = vadd.f32 %v1015, %v1016
  %v1018 = vrot.slane %v1017, 1
  %v1019 = vadd.f32 %v1017, %v1018
  %v1020 = vmul.f32 %v1012, %v93
  %v1021 = vmul.f32 %v1019, %v93
  %v1022 = vmul.f32 %v974, %v974
  %v1023 = vmul.f32 %v1002, %v1002
  %v1024 = vmul.f32 %v976, %v976
  %v1025 = vmul.f32 %v1004, %v1004
  %v1026 = vadd.f32 %v1022, %v1024
  %v1027 = vrot.slane %v1026, 4
  %v1028 = vadd.f32 %v1026, %v1027
  %v1029 = vrot.slane %v1028, 2
  %v1030 = vadd.f32 %v1028, %v1029
  %v1031 = vrot.slane %v1030, 1
  %v1032 = vadd.f32 %v1030, %v1031
  %v1033 = vadd.f32 %v1023, %v1025
  %v1034 = vrot.slane %v1033, 4
  %v1035 = vadd.f32 %v1033, %v1034
  %v1036 = vrot.slane %v1035, 2
  %v1037 = vadd.f32 %v1035, %v1036
  %v1038 = vrot.slane %v1037, 1
  %v1039 = vadd.f32 %v1037, %v1038
  %v1040 = vmul.f32 %v1032, %v93
  %v1041 = vmul.f32 %v1039, %v93
  %v1042 = vmul.f32 %v1020, %v1020
  %v1043 = vmul.f32 %v1021, %v1021
  %v1044 = vsub.f32 %v1040, %v1042
  %v1045 = vsub.f32 %v1041, %v1043
  %v1046 = vmax.f32 %v1044, 0.0
  %v1047 = vmax.f32 %v1045, 0.0
  %v1048 = vsub.f32 %v974, %v1020
  %v1049 = vsub.f32 %v1002, %v1021
  %v1050 = vsub.f32 %v976, %v1020
  %v1051 = vsub.f32 %v1004, %v1021
  %v1052 = vadd.f32 %v1046, 1e-05
  %v1053 = vadd.f32 %v1047, 1e-05
  %v1054 = vrsqrt.pop %v1052
  %v1055 = vmul.f32 %v1054, %v1052
  %v1056 = vmul.f32 %v1055, %v1054
  %v1057 = vmul.f32 0.5, %v1056
  %v1058 = vsub.f32 1.5, %v1057
  %v1059 = vmul.f32 %v1054, %v1058
  %vm1060 = vweird.f32 %v1052
  %vm1061 = vweird.f32 %v1054
  %vm1062 = vmor %vm1060, %vm1061
  %v1063 = vsel %vm1062, %v1054, %v1059
  %v1064 = vrsqrt.pop %v1053
  %v1065 = vmul.f32 %v1064, %v1053
  %v1066 = vmul.f32 %v1065, %v1064
  %v1067 = vmul.f32 0.5, %v1066
  %v1068 = vsub.f32 1.5, %v1067
  %v1069 = vmul.f32 %v1064, %v1068
  %vm1070 = vweird.f32 %v1053
  %vm1071 = vweird.f32 %v1064
  %vm1072 = vmor %vm1070, %vm1071
  %v1073 = vsel %vm1072, %v1064, %v1069
  %v1074 = vmul.f32 %v1048, %v1063
  %v1075 = vmul.f32 %v1049, %v1073
  %v1076 = vmul.f32 %v1050, %v1063
  %v1077 = vmul.f32 %v1051, %v1073
  %v1078 = vadd.f32 %v1074, %v548
  %v1079 = vadd.f32 %v1075, %v548
  %v1080 = vadd.f32 %v1076, %v549
  %v1081 = vadd.f32 %v1077, %v549
  %v1082 = vmax.f32 %v1078, 0.0
  %v1083 = vmax.f32 %v1079, 0.0
  %v1084 = vmax.f32 %v1080, 0.0
  %v1085 = vmax.f32 %v1081, 0.0
  %v1086 = vpack.c.bf16 %v1083, %v1082
  %v1087 = vpack.c.bf16 %v1085, %v1084
  %v1088 = vunpack.c.l.bf16 %v1086
  %v1089 = vunpack.c.h.bf16 %v1086
  %v1090 = vunpack.c.l.bf16 %v1087
  %v1091 = vunpack.c.h.bf16 %v1087
  %v1092 = vld [vmem:[%s8] sm:$0xff]
  %v1093 = vld [vmem:[%s8 + $0x8] sm:$0xff]
  %v1094 = vld [vmem:[%s8 + $0x10] sm:$0xff]
  %v1095 = vld [vmem:[%s8 + $0x18] sm:$0xff]
  %v1096 = vld [vmem:[%s8 + $0x20] sm:$0xff]
  %v1097 = vld [vmem:[%s8 + $0x28] sm:$0xff]
  %v1098 = vld [vmem:[%s8 + $0x30] sm:$0xff]
  %v1099 = vld [vmem:[%s8 + $0x38] sm:$0xff]
  %v1100 = vld [vmem:[%s8 + $0x40] sm:$0xff]
  %v1101 = vld [vmem:[%s8 + $0x48] sm:$0xff]
  %v1102 = vld [vmem:[%s8 + $0x50] sm:$0xff]
  %v1103 = vld [vmem:[%s8 + $0x58] sm:$0xff]
  %v1104 = vld [vmem:[%s8 + $0x60] sm:$0xff]
  %v1105 = vld [vmem:[%s8 + $0x68] sm:$0xff]
  %v1106 = vld [vmem:[%s8 + $0x70] sm:$0xff]
  %v1107 = vld [vmem:[%s8 + $0x78] sm:$0xff]
  %v1108 = vld [vmem:[%s8 + $0x80] sm:$0xff]
  %v1109 = vld [vmem:[%s8 + $0x88] sm:$0xff]
  %v1110 = vld [vmem:[%s8 + $0x90] sm:$0xff]
  %v1111 = vld [vmem:[%s8 + $0x98] sm:$0xff]
  %v1112 = vld [vmem:[%s8 + $0xa0] sm:$0xff]
  %v1113 = vld [vmem:[%s8 + $0xa8] sm:$0xff]
  %v1114 = vld [vmem:[%s8 + $0xb0] sm:$0xff]
  %v1115 = vld [vmem:[%s8 + $0xb8] sm:$0xff]
  %v1116 = vld [vmem:[%s8 + $0xc0] sm:$0xff]
  %v1117 = vld [vmem:[%s8 + $0xc8] sm:$0xff]
  %v1118 = vld [vmem:[%s8 + $0xd0] sm:$0xff]
  %v1119 = vld [vmem:[%s8 + $0xd8] sm:$0xff]
  %v1120 = vld [vmem:[%s8 + $0xe0] sm:$0xff]
  %v1121 = vld [vmem:[%s8 + $0xe8] sm:$0xff]
  %v1122 = vld [vmem:[%s8 + $0xf0] sm:$0xff]
  %v1123 = vld [vmem:[%s8 + $0xf8] sm:$0xff]
  %v1124 = vld [vmem:[%s8 + $0x100] sm:$0xff]
  %v1125 = vld [vmem:[%s8 + $0x108] sm:$0xff]
  %v1126 = vld [vmem:[%s8 + $0x110] sm:$0xff]
  %v1127 = vld [vmem:[%s8 + $0x118] sm:$0xff]
  %v1128 = vld [vmem:[%s8 + $0x120] sm:$0xff]
  %v1129 = vld [vmem:[%s8 + $0x128] sm:$0xff]
  %v1130 = vld [vmem:[%s8 + $0x130] sm:$0xff]
  %v1131 = vld [vmem:[%s8 + $0x138] sm:$0xff]
  %v1132 = vld [vmem:[%s8 + $0x140] sm:$0xff]
  %v1133 = vld [vmem:[%s8 + $0x148] sm:$0xff]
  %v1134 = vld [vmem:[%s8 + $0x150] sm:$0xff]
  %v1135 = vld [vmem:[%s8 + $0x158] sm:$0xff]
  %v1136 = vld [vmem:[%s8 + $0x160] sm:$0xff]
  %v1137 = vld [vmem:[%s8 + $0x168] sm:$0xff]
  %v1138 = vld [vmem:[%s8 + $0x170] sm:$0xff]
  %v1139 = vld [vmem:[%s8 + $0x178] sm:$0xff]
  %v1140 = vld [vmem:[%s8 + $0x180] sm:$0xff]
  %v1141 = vld [vmem:[%s8 + $0x188] sm:$0xff]
  %v1142 = vld [vmem:[%s8 + $0x190] sm:$0xff]
  %v1143 = vld [vmem:[%s8 + $0x198] sm:$0xff]
  %v1144 = vld [vmem:[%s8 + $0x1a0] sm:$0xff]
  %v1145 = vld [vmem:[%s8 + $0x1a8] sm:$0xff]
  %v1146 = vld [vmem:[%s8 + $0x1b0] sm:$0xff]
  %v1147 = vld [vmem:[%s8 + $0x1b8] sm:$0xff]
  %v1148 = vld [vmem:[%s8 + $0x1c0] sm:$0xff]
  %v1149 = vld [vmem:[%s8 + $0x1c8] sm:$0xff]
  %v1150 = vld [vmem:[%s8 + $0x1d0] sm:$0xff]
  %v1151 = vld [vmem:[%s8 + $0x1d8] sm:$0xff]
  %v1152 = vld [vmem:[%s8 + $0x1e0] sm:$0xff]
  %v1153 = vld [vmem:[%s8 + $0x1e8] sm:$0xff]
  %v1154 = vld [vmem:[%s8 + $0x1f0] sm:$0xff]
  %v1155 = vld [vmem:[%s8 + $0x1f8] sm:$0xff]
  %v1158 = vunpack.c.l.b16 %v1086
  %v1159 = vunpack.c.h.b16 %v1086
  %v1160 = vunpack.c.l.b16 %v1087
  %v1161 = vunpack.c.h.b16 %v1087
  %v1162 = vpack.c.b16 %v1160, %v1158
  %v1163 = vpack.c.b16 %v1161, %v1159
  %v1230 = vunpack.c.l.b16 %v1092
  %v1231 = vunpack.c.h.b16 %v1092
  %v1232 = vunpack.c.l.b16 %v1093
  %v1233 = vunpack.c.h.b16 %v1093
  %v1234 = vunpack.c.l.b16 %v1094
  %v1235 = vunpack.c.h.b16 %v1094
  %v1236 = vunpack.c.l.b16 %v1095
  %v1237 = vunpack.c.h.b16 %v1095
  %v1238 = vunpack.c.l.b16 %v1096
  %v1239 = vunpack.c.h.b16 %v1096
  %v1240 = vunpack.c.l.b16 %v1097
  %v1241 = vunpack.c.h.b16 %v1097
  %v1242 = vunpack.c.l.b16 %v1098
  %v1243 = vunpack.c.h.b16 %v1098
  %v1244 = vunpack.c.l.b16 %v1099
  %v1245 = vunpack.c.h.b16 %v1099
  %v1246 = vunpack.c.l.b16 %v1100
  %v1247 = vunpack.c.h.b16 %v1100
  %v1248 = vunpack.c.l.b16 %v1101
  %v1249 = vunpack.c.h.b16 %v1101
  %v1250 = vunpack.c.l.b16 %v1102
  %v1251 = vunpack.c.h.b16 %v1102
  %v1252 = vunpack.c.l.b16 %v1103
  %v1253 = vunpack.c.h.b16 %v1103
  %v1254 = vunpack.c.l.b16 %v1104
  %v1255 = vunpack.c.h.b16 %v1104
  %v1256 = vunpack.c.l.b16 %v1105
  %v1257 = vunpack.c.h.b16 %v1105
  %v1258 = vunpack.c.l.b16 %v1106
  %v1259 = vunpack.c.h.b16 %v1106
  %v1260 = vunpack.c.l.b16 %v1107
  %v1261 = vunpack.c.h.b16 %v1107
  %v1262 = vunpack.c.l.b16 %v1108
  %v1263 = vunpack.c.h.b16 %v1108
  %v1264 = vunpack.c.l.b16 %v1109
  %v1265 = vunpack.c.h.b16 %v1109
  %v1266 = vunpack.c.l.b16 %v1110
  %v1267 = vunpack.c.h.b16 %v1110
  %v1268 = vunpack.c.l.b16 %v1111
  %v1269 = vunpack.c.h.b16 %v1111
  %v1270 = vunpack.c.l.b16 %v1112
  %v1271 = vunpack.c.h.b16 %v1112
  %v1272 = vunpack.c.l.b16 %v1113
  %v1273 = vunpack.c.h.b16 %v1113
  %v1274 = vunpack.c.l.b16 %v1114
  %v1275 = vunpack.c.h.b16 %v1114
  %v1276 = vunpack.c.l.b16 %v1115
  %v1277 = vunpack.c.h.b16 %v1115
  %v1278 = vunpack.c.l.b16 %v1116
  %v1279 = vunpack.c.h.b16 %v1116
  %v1280 = vunpack.c.l.b16 %v1117
  %v1281 = vunpack.c.h.b16 %v1117
  %v1282 = vunpack.c.l.b16 %v1118
  %v1283 = vunpack.c.h.b16 %v1118
  %v1284 = vunpack.c.l.b16 %v1119
  %v1285 = vunpack.c.h.b16 %v1119
  %v1286 = vunpack.c.l.b16 %v1120
  %v1287 = vunpack.c.h.b16 %v1120
  %v1288 = vunpack.c.l.b16 %v1121
  %v1289 = vunpack.c.h.b16 %v1121
  %v1290 = vunpack.c.l.b16 %v1122
  %v1291 = vunpack.c.h.b16 %v1122
  %v1292 = vunpack.c.l.b16 %v1123
  %v1293 = vunpack.c.h.b16 %v1123
  %v1294 = vunpack.c.l.b16 %v1124
  %v1295 = vunpack.c.h.b16 %v1124
  %v1296 = vunpack.c.l.b16 %v1125
  %v1297 = vunpack.c.h.b16 %v1125
  %v1298 = vunpack.c.l.b16 %v1126
  %v1299 = vunpack.c.h.b16 %v1126
  %v1300 = vunpack.c.l.b16 %v1127
  %v1301 = vunpack.c.h.b16 %v1127
  %v1302 = vunpack.c.l.b16 %v1128
  %v1303 = vunpack.c.h.b16 %v1128
  %v1304 = vunpack.c.l.b16 %v1129
  %v1305 = vunpack.c.h.b16 %v1129
  %v1306 = vunpack.c.l.b16 %v1130
  %v1307 = vunpack.c.h.b16 %v1130
  %v1308 = vunpack.c.l.b16 %v1131
  %v1309 = vunpack.c.h.b16 %v1131
  %v1310 = vunpack.c.l.b16 %v1132
  %v1311 = vunpack.c.h.b16 %v1132
  %v1312 = vunpack.c.l.b16 %v1133
  %v1313 = vunpack.c.h.b16 %v1133
  %v1314 = vunpack.c.l.b16 %v1134
  %v1315 = vunpack.c.h.b16 %v1134
  %v1316 = vunpack.c.l.b16 %v1135
  %v1317 = vunpack.c.h.b16 %v1135
  %v1318 = vunpack.c.l.b16 %v1136
  %v1319 = vunpack.c.h.b16 %v1136
  %v1320 = vunpack.c.l.b16 %v1137
  %v1321 = vunpack.c.h.b16 %v1137
  %v1322 = vunpack.c.l.b16 %v1138
  %v1323 = vunpack.c.h.b16 %v1138
  %v1324 = vunpack.c.l.b16 %v1139
  %v1325 = vunpack.c.h.b16 %v1139
  %v1326 = vunpack.c.l.b16 %v1140
  %v1327 = vunpack.c.h.b16 %v1140
  %v1328 = vunpack.c.l.b16 %v1141
  %v1329 = vunpack.c.h.b16 %v1141
  %v1330 = vunpack.c.l.b16 %v1142
  %v1331 = vunpack.c.h.b16 %v1142
  %v1332 = vunpack.c.l.b16 %v1143
  %v1333 = vunpack.c.h.b16 %v1143
  %v1334 = vunpack.c.l.b16 %v1144
  %v1335 = vunpack.c.h.b16 %v1144
  %v1336 = vunpack.c.l.b16 %v1145
  %v1337 = vunpack.c.h.b16 %v1145
  %v1338 = vunpack.c.l.b16 %v1146
  %v1339 = vunpack.c.h.b16 %v1146
  %v1340 = vunpack.c.l.b16 %v1147
  %v1341 = vunpack.c.h.b16 %v1147
  %v1342 = vunpack.c.l.b16 %v1148
  %v1343 = vunpack.c.h.b16 %v1148
  %v1344 = vunpack.c.l.b16 %v1149
  %v1345 = vunpack.c.h.b16 %v1149
  %v1346 = vunpack.c.l.b16 %v1150
  %v1347 = vunpack.c.h.b16 %v1150
  %v1348 = vunpack.c.l.b16 %v1151
  %v1349 = vunpack.c.h.b16 %v1151
  %v1350 = vunpack.c.l.b16 %v1152
  %v1351 = vunpack.c.h.b16 %v1152
  %v1352 = vunpack.c.l.b16 %v1153
  %v1353 = vunpack.c.h.b16 %v1153
  %v1354 = vunpack.c.l.b16 %v1154
  %v1355 = vunpack.c.h.b16 %v1154
  %v1356 = vunpack.c.l.b16 %v1155
  %v1357 = vunpack.c.h.b16 %v1155
  %v1358 = vpack.c.b16 %v1234, %v1230
  %v1359 = vpack.c.b16 %v1235, %v1231
  %v1360 = vpack.c.b16 %v1236, %v1232
  %v1361 = vpack.c.b16 %v1237, %v1233
  %v1362 = vpack.c.b16 %v1242, %v1238
  %v1363 = vpack.c.b16 %v1243, %v1239
  %v1364 = vpack.c.b16 %v1244, %v1240
  %v1365 = vpack.c.b16 %v1245, %v1241
  %v1366 = vpack.c.b16 %v1250, %v1246
  %v1367 = vpack.c.b16 %v1251, %v1247
  %v1368 = vpack.c.b16 %v1252, %v1248
  %v1369 = vpack.c.b16 %v1253, %v1249
  %v1370 = vpack.c.b16 %v1258, %v1254
  %v1371 = vpack.c.b16 %v1259, %v1255
  %v1372 = vpack.c.b16 %v1260, %v1256
  %v1373 = vpack.c.b16 %v1261, %v1257
  %v1374 = vpack.c.b16 %v1266, %v1262
  %v1375 = vpack.c.b16 %v1267, %v1263
  %v1376 = vpack.c.b16 %v1268, %v1264
  %v1377 = vpack.c.b16 %v1269, %v1265
  %v1378 = vpack.c.b16 %v1274, %v1270
  %v1379 = vpack.c.b16 %v1275, %v1271
  %v1380 = vpack.c.b16 %v1276, %v1272
  %v1381 = vpack.c.b16 %v1277, %v1273
  %v1382 = vpack.c.b16 %v1282, %v1278
  %v1383 = vpack.c.b16 %v1283, %v1279
  %v1384 = vpack.c.b16 %v1284, %v1280
  %v1385 = vpack.c.b16 %v1285, %v1281
  %v1386 = vpack.c.b16 %v1290, %v1286
  %v1387 = vpack.c.b16 %v1291, %v1287
  %v1388 = vpack.c.b16 %v1292, %v1288
  %v1389 = vpack.c.b16 %v1293, %v1289
  %v1390 = vpack.c.b16 %v1298, %v1294
  %v1391 = vpack.c.b16 %v1299, %v1295
  %v1392 = vpack.c.b16 %v1300, %v1296
  %v1393 = vpack.c.b16 %v1301, %v1297
  %v1394 = vpack.c.b16 %v1306, %v1302
  %v1395 = vpack.c.b16 %v1307, %v1303
  %v1396 = vpack.c.b16 %v1308, %v1304
  %v1397 = vpack.c.b16 %v1309, %v1305
  %v1398 = vpack.c.b16 %v1314, %v1310
  %v1399 = vpack.c.b16 %v1315, %v1311
  %v1400 = vpack.c.b16 %v1316, %v1312
  %v1401 = vpack.c.b16 %v1317, %v1313
  %v1402 = vpack.c.b16 %v1322, %v1318
  %v1403 = vpack.c.b16 %v1323, %v1319
  %v1404 = vpack.c.b16 %v1324, %v1320
  %v1405 = vpack.c.b16 %v1325, %v1321
  %v1406 = vpack.c.b16 %v1330, %v1326
  %v1407 = vpack.c.b16 %v1331, %v1327
  %v1408 = vpack.c.b16 %v1332, %v1328
  %v1409 = vpack.c.b16 %v1333, %v1329
  %v1410 = vpack.c.b16 %v1338, %v1334
  %v1411 = vpack.c.b16 %v1339, %v1335
  %v1412 = vpack.c.b16 %v1340, %v1336
  %v1413 = vpack.c.b16 %v1341, %v1337
  %v1414 = vpack.c.b16 %v1346, %v1342
  %v1415 = vpack.c.b16 %v1347, %v1343
  %v1416 = vpack.c.b16 %v1348, %v1344
  %v1417 = vpack.c.b16 %v1349, %v1345
  %v1418 = vpack.c.b16 %v1354, %v1350
  %v1419 = vpack.c.b16 %v1355, %v1351
  %v1420 = vpack.c.b16 %v1356, %v1352
  %v1421 = vpack.c.b16 %v1357, %v1353
  %1486 = vmatpush.bf16.msra.mxu0 %v1386
  %1487 = vmatpush.bf16.msra.mxu0 %v1382
  %1488 = vmatpush.bf16.msra.mxu0 %v1378
  %1489 = vmatpush.bf16.msra.mxu0 %v1374
  %1490 = vmatpush.bf16.msra.mxu0 %v1370
  %1491 = vmatpush.bf16.msra.mxu0 %v1366
  %1492 = vmatpush.bf16.msra.mxu0 %v1362
  %1493 = vmatpush.bf16.msra.mxu0 %v1358
  %1494 = vmatmul.bf16.gmra.mxu0 %v1162
  %v1495 = vpop.f32.mrf.mxu0
  %v1496 = vadd.f32 0.0, %v1495
  %v1497 = vpop.f32.mrf.mxu0
  %v1498 = vadd.f32 0.0, %v1497
  %1499 = vdwg.mxu0
  %1500 = vmatpush.bf16.msra.mxu0 %v1418
  %1501 = vmatpush.bf16.msra.mxu0 %v1414
  %1502 = vmatpush.bf16.msra.mxu0 %v1410
  %1503 = vmatpush.bf16.msra.mxu0 %v1406
  %1504 = vmatpush.bf16.msra.mxu0 %v1402
  %1505 = vmatpush.bf16.msra.mxu0 %v1398
  %1506 = vmatpush.bf16.msra.mxu0 %v1394
  %1507 = vmatpush.bf16.msra.mxu0 %v1390
  %1508 = vmatmul.bf16.gmra.mxu0 %v1163
  %v1509 = vpop.f32.mrf.mxu0
  %v1510 = vadd.f32 %v1496, %v1509
  %v1511 = vpop.f32.mrf.mxu0
  %v1512 = vadd.f32 %v1498, %v1511
  %1513 = vdwg.mxu0
  %1514 = vmatpush.bf16.msra.mxu0 %v1387
  %1515 = vmatpush.bf16.msra.mxu0 %v1383
  %1516 = vmatpush.bf16.msra.mxu0 %v1379
  %1517 = vmatpush.bf16.msra.mxu0 %v1375
  %1518 = vmatpush.bf16.msra.mxu0 %v1371
  %1519 = vmatpush.bf16.msra.mxu0 %v1367
  %1520 = vmatpush.bf16.msra.mxu0 %v1363
  %1521 = vmatpush.bf16.msra.mxu0 %v1359
  %1522 = vmatmul.bf16.gmra.mxu0 %v1162
  %v1523 = vpop.f32.mrf.mxu0
  %v1524 = vadd.f32 0.0, %v1523
  %v1525 = vpop.f32.mrf.mxu0
  %v1526 = vadd.f32 0.0, %v1525
  %1527 = vdwg.mxu0
  %1528 = vmatpush.bf16.msra.mxu0 %v1419
  %1529 = vmatpush.bf16.msra.mxu0 %v1415
  %1530 = vmatpush.bf16.msra.mxu0 %v1411
  %1531 = vmatpush.bf16.msra.mxu0 %v1407
  %1532 = vmatpush.bf16.msra.mxu0 %v1403
  %1533 = vmatpush.bf16.msra.mxu0 %v1399
  %1534 = vmatpush.bf16.msra.mxu0 %v1395
  %1535 = vmatpush.bf16.msra.mxu0 %v1391
  %1536 = vmatmul.bf16.gmra.mxu0 %v1163
  %v1537 = vpop.f32.mrf.mxu0
  %v1538 = vadd.f32 %v1524, %v1537
  %v1539 = vpop.f32.mrf.mxu0
  %v1540 = vadd.f32 %v1526, %v1539
  %1541 = vdwg.mxu0
  %1542 = vmatpush.bf16.msra.mxu0 %v1388
  %1543 = vmatpush.bf16.msra.mxu0 %v1384
  %1544 = vmatpush.bf16.msra.mxu0 %v1380
  %1545 = vmatpush.bf16.msra.mxu0 %v1376
  %1546 = vmatpush.bf16.msra.mxu0 %v1372
  %1547 = vmatpush.bf16.msra.mxu0 %v1368
  %1548 = vmatpush.bf16.msra.mxu0 %v1364
  %1549 = vmatpush.bf16.msra.mxu0 %v1360
  %1550 = vmatmul.bf16.gmra.mxu0 %v1162
  %v1551 = vpop.f32.mrf.mxu0
  %v1552 = vadd.f32 0.0, %v1551
  %v1553 = vpop.f32.mrf.mxu0
  %v1554 = vadd.f32 0.0, %v1553
  %1555 = vdwg.mxu0
  %1556 = vmatpush.bf16.msra.mxu0 %v1420
  %1557 = vmatpush.bf16.msra.mxu0 %v1416
  %1558 = vmatpush.bf16.msra.mxu0 %v1412
  %1559 = vmatpush.bf16.msra.mxu0 %v1408
  %1560 = vmatpush.bf16.msra.mxu0 %v1404
  %1561 = vmatpush.bf16.msra.mxu0 %v1400
  %1562 = vmatpush.bf16.msra.mxu0 %v1396
  %1563 = vmatpush.bf16.msra.mxu0 %v1392
  %1564 = vmatmul.bf16.gmra.mxu0 %v1163
  %v1565 = vpop.f32.mrf.mxu0
  %v1566 = vadd.f32 %v1552, %v1565
  %v1567 = vpop.f32.mrf.mxu0
  %v1568 = vadd.f32 %v1554, %v1567
  %1569 = vdwg.mxu0
  %1570 = vmatpush.bf16.msra.mxu0 %v1389
  %1571 = vmatpush.bf16.msra.mxu0 %v1385
  %1572 = vmatpush.bf16.msra.mxu0 %v1381
  %1573 = vmatpush.bf16.msra.mxu0 %v1377
  %1574 = vmatpush.bf16.msra.mxu0 %v1373
  %1575 = vmatpush.bf16.msra.mxu0 %v1369
  %1576 = vmatpush.bf16.msra.mxu0 %v1365
  %1577 = vmatpush.bf16.msra.mxu0 %v1361
  %1578 = vmatmul.bf16.gmra.mxu0 %v1162
  %v1579 = vpop.f32.mrf.mxu0
  %v1580 = vadd.f32 0.0, %v1579
  %v1581 = vpop.f32.mrf.mxu0
  %v1582 = vadd.f32 0.0, %v1581
  %1583 = vdwg.mxu0
  %1584 = vmatpush.bf16.msra.mxu0 %v1421
  %1585 = vmatpush.bf16.msra.mxu0 %v1417
  %1586 = vmatpush.bf16.msra.mxu0 %v1413
  %1587 = vmatpush.bf16.msra.mxu0 %v1409
  %1588 = vmatpush.bf16.msra.mxu0 %v1405
  %1589 = vmatpush.bf16.msra.mxu0 %v1401
  %1590 = vmatpush.bf16.msra.mxu0 %v1397
  %1591 = vmatpush.bf16.msra.mxu0 %v1393
  %1592 = vmatmul.bf16.gmra.mxu0 %v1163
  %v1593 = vpop.f32.mrf.mxu0
  %v1594 = vadd.f32 %v1580, %v1593
  %v1595 = vpop.f32.mrf.mxu0
  %v1596 = vadd.f32 %v1582, %v1595
  %1597 = vdwg.mxu0
  %v1598 = vadd.f32 %v1510, %v1512
  %v1599 = vrot.slane %v1598, 4
  %v1600 = vadd.f32 %v1598, %v1599
  %v1601 = vrot.slane %v1600, 2
  %v1602 = vadd.f32 %v1600, %v1601
  %v1603 = vrot.slane %v1602, 1
  %v1604 = vadd.f32 %v1602, %v1603
  %v1605 = vadd.f32 %v1538, %v1540
  %v1606 = vrot.slane %v1605, 4
  %v1607 = vadd.f32 %v1605, %v1606
  %v1608 = vrot.slane %v1607, 2
  %v1609 = vadd.f32 %v1607, %v1608
  %v1610 = vrot.slane %v1609, 1
  %v1611 = vadd.f32 %v1609, %v1610
  %v1612 = vadd.f32 %v1566, %v1568
  %v1613 = vrot.slane %v1612, 4
  %v1614 = vadd.f32 %v1612, %v1613
  %v1615 = vrot.slane %v1614, 2
  %v1616 = vadd.f32 %v1614, %v1615
  %v1617 = vrot.slane %v1616, 1
  %v1618 = vadd.f32 %v1616, %v1617
  %v1619 = vadd.f32 %v1594, %v1596
  %v1620 = vrot.slane %v1619, 4
  %v1621 = vadd.f32 %v1619, %v1620
  %v1622 = vrot.slane %v1621, 2
  %v1623 = vadd.f32 %v1621, %v1622
  %v1624 = vrot.slane %v1623, 1
  %v1625 = vadd.f32 %v1623, %v1624
  %v1626 = vmul.f32 %v1604, %v93
  %v1627 = vmul.f32 %v1611, %v93
  %v1628 = vmul.f32 %v1618, %v93
  %v1629 = vmul.f32 %v1625, %v93
  %v1630 = vmul.f32 %v1510, %v1510
  %v1631 = vmul.f32 %v1538, %v1538
  %v1632 = vmul.f32 %v1566, %v1566
  %v1633 = vmul.f32 %v1594, %v1594
  %v1634 = vmul.f32 %v1512, %v1512
  %v1635 = vmul.f32 %v1540, %v1540
  %v1636 = vmul.f32 %v1568, %v1568
  %v1637 = vmul.f32 %v1596, %v1596
  %v1638 = vadd.f32 %v1630, %v1634
  %v1639 = vrot.slane %v1638, 4
  %v1640 = vadd.f32 %v1638, %v1639
  %v1641 = vrot.slane %v1640, 2
  %v1642 = vadd.f32 %v1640, %v1641
  %v1643 = vrot.slane %v1642, 1
  %v1644 = vadd.f32 %v1642, %v1643
  %v1645 = vadd.f32 %v1631, %v1635
  %v1646 = vrot.slane %v1645, 4
  %v1647 = vadd.f32 %v1645, %v1646
  %v1648 = vrot.slane %v1647, 2
  %v1649 = vadd.f32 %v1647, %v1648
  %v1650 = vrot.slane %v1649, 1
  %v1651 = vadd.f32 %v1649, %v1650
  %v1652 = vadd.f32 %v1632, %v1636
  %v1653 = vrot.slane %v1652, 4
  %v1654 = vadd.f32 %v1652, %v1653
  %v1655 = vrot.slane %v1654, 2
  %v1656 = vadd.f32 %v1654, %v1655
  %v1657 = vrot.slane %v1656, 1
  %v1658 = vadd.f32 %v1656, %v1657
  %v1659 = vadd.f32 %v1633, %v1637
  %v1660 = vrot.slane %v1659, 4
  %v1661 = vadd.f32 %v1659, %v1660
  %v1662 = vrot.slane %v1661, 2
  %v1663 = vadd.f32 %v1661, %v1662
  %v1664 = vrot.slane %v1663, 1
  %v1665 = vadd.f32 %v1663, %v1664
  %v1666 = vmul.f32 %v1644, %v93
  %v1667 = vmul.f32 %v1651, %v93
  %v1668 = vmul.f32 %v1658, %v93
  %v1669 = vmul.f32 %v1665, %v93
  %v1670 = vmul.f32 %v1626, %v1626
  %v1671 = vmul.f32 %v1627, %v1627
  %v1672 = vmul.f32 %v1628, %v1628
  %v1673 = vmul.f32 %v1629, %v1629
  %v1674 = vsub.f32 %v1666, %v1670
  %v1675 = vsub.f32 %v1667, %v1671
  %v1676 = vsub.f32 %v1668, %v1672
  %v1677 = vsub.f32 %v1669, %v1673
  %v1678 = vmax.f32 %v1674, 0.0
  %v1679 = vmax.f32 %v1675, 0.0
  %v1680 = vmax.f32 %v1676, 0.0
  %v1681 = vmax.f32 %v1677, 0.0
  %v1682 = vsub.f32 %v1510, %v1626
  %v1683 = vsub.f32 %v1538, %v1627
  %v1684 = vsub.f32 %v1566, %v1628
  %v1685 = vsub.f32 %v1594, %v1629
  %v1686 = vsub.f32 %v1512, %v1626
  %v1687 = vsub.f32 %v1540, %v1627
  %v1688 = vsub.f32 %v1568, %v1628
  %v1689 = vsub.f32 %v1596, %v1629
  %v1690 = vadd.f32 %v1678, 1e-05
  %v1691 = vadd.f32 %v1679, 1e-05
  %v1692 = vadd.f32 %v1680, 1e-05
  %v1693 = vadd.f32 %v1681, 1e-05
  %v1694 = vrsqrt.pop %v1690
  %v1695 = vmul.f32 %v1694, %v1690
  %v1696 = vmul.f32 %v1695, %v1694
  %v1697 = vmul.f32 0.5, %v1696
  %v1698 = vsub.f32 1.5, %v1697
  %v1699 = vmul.f32 %v1694, %v1698
  %vm1700 = vweird.f32 %v1690
  %vm1701 = vweird.f32 %v1694
  %vm1702 = vmor %vm1700, %vm1701
  %v1703 = vsel %vm1702, %v1694, %v1699
  %v1704 = vrsqrt.pop %v1691
  %v1705 = vmul.f32 %v1704, %v1691
  %v1706 = vmul.f32 %v1705, %v1704
  %v1707 = vmul.f32 0.5, %v1706
  %v1708 = vsub.f32 1.5, %v1707
  %v1709 = vmul.f32 %v1704, %v1708
  %vm1710 = vweird.f32 %v1691
  %vm1711 = vweird.f32 %v1704
  %vm1712 = vmor %vm1710, %vm1711
  %v1713 = vsel %vm1712, %v1704, %v1709
  %v1714 = vrsqrt.pop %v1692
  %v1715 = vmul.f32 %v1714, %v1692
  %v1716 = vmul.f32 %v1715, %v1714
  %v1717 = vmul.f32 0.5, %v1716
  %v1718 = vsub.f32 1.5, %v1717
  %v1719 = vmul.f32 %v1714, %v1718
  %vm1720 = vweird.f32 %v1692
  %vm1721 = vweird.f32 %v1714
  %vm1722 = vmor %vm1720, %vm1721
  %v1723 = vsel %vm1722, %v1714, %v1719
  %v1724 = vrsqrt.pop %v1693
  %v1725 = vmul.f32 %v1724, %v1693
  %v1726 = vmul.f32 %v1725, %v1724
  %v1727 = vmul.f32 0.5, %v1726
  %v1728 = vsub.f32 1.5, %v1727
  %v1729 = vmul.f32 %v1724, %v1728
  %vm1730 = vweird.f32 %v1693
  %vm1731 = vweird.f32 %v1724
  %vm1732 = vmor %vm1730, %vm1731
  %v1733 = vsel %vm1732, %v1724, %v1729
  %v1734 = vmul.f32 %v1682, %v1703
  %v1735 = vmul.f32 %v1683, %v1713
  %v1736 = vmul.f32 %v1684, %v1723
  %v1737 = vmul.f32 %v1685, %v1733
  %v1738 = vmul.f32 %v1686, %v1703
  %v1739 = vmul.f32 %v1687, %v1713
  %v1740 = vmul.f32 %v1688, %v1723
  %v1741 = vmul.f32 %v1689, %v1733
  %v1742 = vmax.f32 %v1734, 0.0
  %v1743 = vmax.f32 %v1735, 0.0
  %v1744 = vmax.f32 %v1736, 0.0
  %v1745 = vmax.f32 %v1737, 0.0
  %v1746 = vmax.f32 %v1738, 0.0
  %v1747 = vmax.f32 %v1739, 0.0
  %v1748 = vmax.f32 %v1740, 0.0
  %v1749 = vmax.f32 %v1741, 0.0
  %v1750 = vpack.c.bf16 %v1746, %v1742
  %v1751 = vpack.c.bf16 %v1747, %v1743
  %v1752 = vpack.c.bf16 %v1748, %v1744
  %v1753 = vpack.c.bf16 %v1749, %v1745
  %v1754 = vld [vmem:[%s9] sm:$0xff]
  %v1755 = vld [vmem:[%s9 + $0x8] sm:$0xff]
  %v1756 = vld [vmem:[%s9 + $0x10] sm:$0xff]
  %v1757 = vld [vmem:[%s9 + $0x18] sm:$0xff]
  %v1758 = vld [vmem:[%s9 + $0x20] sm:$0xff]
  %v1759 = vld [vmem:[%s9 + $0x28] sm:$0xff]
  %v1760 = vld [vmem:[%s9 + $0x30] sm:$0xff]
  %v1761 = vld [vmem:[%s9 + $0x38] sm:$0xff]
  %v1762 = vld [vmem:[%s9 + $0x40] sm:$0xff]
  %v1763 = vld [vmem:[%s9 + $0x48] sm:$0xff]
  %v1764 = vld [vmem:[%s9 + $0x50] sm:$0xff]
  %v1765 = vld [vmem:[%s9 + $0x58] sm:$0xff]
  %v1766 = vld [vmem:[%s9 + $0x60] sm:$0xff]
  %v1767 = vld [vmem:[%s9 + $0x68] sm:$0xff]
  %v1768 = vld [vmem:[%s9 + $0x70] sm:$0xff]
  %v1769 = vld [vmem:[%s9 + $0x78] sm:$0xff]
  %v1770 = vld [vmem:[%s9 + $0x80] sm:$0xff]
  %v1771 = vld [vmem:[%s9 + $0x88] sm:$0xff]
  %v1772 = vld [vmem:[%s9 + $0x90] sm:$0xff]
  %v1773 = vld [vmem:[%s9 + $0x98] sm:$0xff]
  %v1774 = vld [vmem:[%s9 + $0xa0] sm:$0xff]
  %v1775 = vld [vmem:[%s9 + $0xa8] sm:$0xff]
  %v1776 = vld [vmem:[%s9 + $0xb0] sm:$0xff]
  %v1777 = vld [vmem:[%s9 + $0xb8] sm:$0xff]
  %v1778 = vld [vmem:[%s9 + $0xc0] sm:$0xff]
  %v1779 = vld [vmem:[%s9 + $0xc8] sm:$0xff]
  %v1780 = vld [vmem:[%s9 + $0xd0] sm:$0xff]
  %v1781 = vld [vmem:[%s9 + $0xd8] sm:$0xff]
  %v1782 = vld [vmem:[%s9 + $0xe0] sm:$0xff]
  %v1783 = vld [vmem:[%s9 + $0xe8] sm:$0xff]
  %v1784 = vld [vmem:[%s9 + $0xf0] sm:$0xff]
  %v1785 = vld [vmem:[%s9 + $0xf8] sm:$0xff]
  %v1786 = vld [vmem:[%s9 + $0x100] sm:$0xff]
  %v1787 = vld [vmem:[%s9 + $0x108] sm:$0xff]
  %v1788 = vld [vmem:[%s9 + $0x110] sm:$0xff]
  %v1789 = vld [vmem:[%s9 + $0x118] sm:$0xff]
  %v1790 = vld [vmem:[%s9 + $0x120] sm:$0xff]
  %v1791 = vld [vmem:[%s9 + $0x128] sm:$0xff]
  %v1792 = vld [vmem:[%s9 + $0x130] sm:$0xff]
  %v1793 = vld [vmem:[%s9 + $0x138] sm:$0xff]
  %v1794 = vld [vmem:[%s9 + $0x140] sm:$0xff]
  %v1795 = vld [vmem:[%s9 + $0x148] sm:$0xff]
  %v1796 = vld [vmem:[%s9 + $0x150] sm:$0xff]
  %v1797 = vld [vmem:[%s9 + $0x158] sm:$0xff]
  %v1798 = vld [vmem:[%s9 + $0x160] sm:$0xff]
  %v1799 = vld [vmem:[%s9 + $0x168] sm:$0xff]
  %v1800 = vld [vmem:[%s9 + $0x170] sm:$0xff]
  %v1801 = vld [vmem:[%s9 + $0x178] sm:$0xff]
  %v1802 = vld [vmem:[%s9 + $0x180] sm:$0xff]
  %v1803 = vld [vmem:[%s9 + $0x188] sm:$0xff]
  %v1804 = vld [vmem:[%s9 + $0x190] sm:$0xff]
  %v1805 = vld [vmem:[%s9 + $0x198] sm:$0xff]
  %v1806 = vld [vmem:[%s9 + $0x1a0] sm:$0xff]
  %v1807 = vld [vmem:[%s9 + $0x1a8] sm:$0xff]
  %v1808 = vld [vmem:[%s9 + $0x1b0] sm:$0xff]
  %v1809 = vld [vmem:[%s9 + $0x1b8] sm:$0xff]
  %v1810 = vld [vmem:[%s9 + $0x1c0] sm:$0xff]
  %v1811 = vld [vmem:[%s9 + $0x1c8] sm:$0xff]
  %v1812 = vld [vmem:[%s9 + $0x1d0] sm:$0xff]
  %v1813 = vld [vmem:[%s9 + $0x1d8] sm:$0xff]
  %v1814 = vld [vmem:[%s9 + $0x1e0] sm:$0xff]
  %v1815 = vld [vmem:[%s9 + $0x1e8] sm:$0xff]
  %v1816 = vld [vmem:[%s9 + $0x1f0] sm:$0xff]
  %v1817 = vld [vmem:[%s9 + $0x1f8] sm:$0xff]
  %v1818 = vld [vmem:[%s9 + $0x200] sm:$0xff]
  %v1819 = vld [vmem:[%s9 + $0x208] sm:$0xff]
  %v1820 = vld [vmem:[%s9 + $0x210] sm:$0xff]
  %v1821 = vld [vmem:[%s9 + $0x218] sm:$0xff]
  %v1822 = vld [vmem:[%s9 + $0x220] sm:$0xff]
  %v1823 = vld [vmem:[%s9 + $0x228] sm:$0xff]
  %v1824 = vld [vmem:[%s9 + $0x230] sm:$0xff]
  %v1825 = vld [vmem:[%s9 + $0x238] sm:$0xff]
  %v1826 = vld [vmem:[%s9 + $0x240] sm:$0xff]
  %v1827 = vld [vmem:[%s9 + $0x248] sm:$0xff]
  %v1828 = vld [vmem:[%s9 + $0x250] sm:$0xff]
  %v1829 = vld [vmem:[%s9 + $0x258] sm:$0xff]
  %v1830 = vld [vmem:[%s9 + $0x260] sm:$0xff]
  %v1831 = vld [vmem:[%s9 + $0x268] sm:$0xff]
  %v1832 = vld [vmem:[%s9 + $0x270] sm:$0xff]
  %v1833 = vld [vmem:[%s9 + $0x278] sm:$0xff]
  %v1834 = vld [vmem:[%s9 + $0x280] sm:$0xff]
  %v1835 = vld [vmem:[%s9 + $0x288] sm:$0xff]
  %v1836 = vld [vmem:[%s9 + $0x290] sm:$0xff]
  %v1837 = vld [vmem:[%s9 + $0x298] sm:$0xff]
  %v1838 = vld [vmem:[%s9 + $0x2a0] sm:$0xff]
  %v1839 = vld [vmem:[%s9 + $0x2a8] sm:$0xff]
  %v1840 = vld [vmem:[%s9 + $0x2b0] sm:$0xff]
  %v1841 = vld [vmem:[%s9 + $0x2b8] sm:$0xff]
  %v1842 = vld [vmem:[%s9 + $0x2c0] sm:$0xff]
  %v1843 = vld [vmem:[%s9 + $0x2c8] sm:$0xff]
  %v1844 = vld [vmem:[%s9 + $0x2d0] sm:$0xff]
  %v1845 = vld [vmem:[%s9 + $0x2d8] sm:$0xff]
  %v1846 = vld [vmem:[%s9 + $0x2e0] sm:$0xff]
  %v1847 = vld [vmem:[%s9 + $0x2e8] sm:$0xff]
  %v1848 = vld [vmem:[%s9 + $0x2f0] sm:$0xff]
  %v1849 = vld [vmem:[%s9 + $0x2f8] sm:$0xff]
  %v1850 = vld [vmem:[%s9 + $0x300] sm:$0xff]
  %v1851 = vld [vmem:[%s9 + $0x308] sm:$0xff]
  %v1852 = vld [vmem:[%s9 + $0x310] sm:$0xff]
  %v1853 = vld [vmem:[%s9 + $0x318] sm:$0xff]
  %v1854 = vld [vmem:[%s9 + $0x320] sm:$0xff]
  %v1855 = vld [vmem:[%s9 + $0x328] sm:$0xff]
  %v1856 = vld [vmem:[%s9 + $0x330] sm:$0xff]
  %v1857 = vld [vmem:[%s9 + $0x338] sm:$0xff]
  %v1858 = vld [vmem:[%s9 + $0x340] sm:$0xff]
  %v1859 = vld [vmem:[%s9 + $0x348] sm:$0xff]
  %v1860 = vld [vmem:[%s9 + $0x350] sm:$0xff]
  %v1861 = vld [vmem:[%s9 + $0x358] sm:$0xff]
  %v1862 = vld [vmem:[%s9 + $0x360] sm:$0xff]
  %v1863 = vld [vmem:[%s9 + $0x368] sm:$0xff]
  %v1864 = vld [vmem:[%s9 + $0x370] sm:$0xff]
  %v1865 = vld [vmem:[%s9 + $0x378] sm:$0xff]
  %v1866 = vld [vmem:[%s9 + $0x380] sm:$0xff]
  %v1867 = vld [vmem:[%s9 + $0x388] sm:$0xff]
  %v1868 = vld [vmem:[%s9 + $0x390] sm:$0xff]
  %v1869 = vld [vmem:[%s9 + $0x398] sm:$0xff]
  %v1870 = vld [vmem:[%s9 + $0x3a0] sm:$0xff]
  %v1871 = vld [vmem:[%s9 + $0x3a8] sm:$0xff]
  %v1872 = vld [vmem:[%s9 + $0x3b0] sm:$0xff]
  %v1873 = vld [vmem:[%s9 + $0x3b8] sm:$0xff]
  %v1874 = vld [vmem:[%s9 + $0x3c0] sm:$0xff]
  %v1875 = vld [vmem:[%s9 + $0x3c8] sm:$0xff]
  %v1876 = vld [vmem:[%s9 + $0x3d0] sm:$0xff]
  %v1877 = vld [vmem:[%s9 + $0x3d8] sm:$0xff]
  %v1878 = vld [vmem:[%s9 + $0x3e0] sm:$0xff]
  %v1879 = vld [vmem:[%s9 + $0x3e8] sm:$0xff]
  %v1880 = vld [vmem:[%s9 + $0x3f0] sm:$0xff]
  %v1881 = vld [vmem:[%s9 + $0x3f8] sm:$0xff]
  %v2010 = vunpack.c.l.b16 %v1754
  %v2011 = vunpack.c.h.b16 %v1754
  %v2012 = vunpack.c.l.b16 %v1755
  %v2013 = vunpack.c.h.b16 %v1755
  %v2014 = vunpack.c.l.b16 %v1756
  %v2015 = vunpack.c.h.b16 %v1756
  %v2016 = vunpack.c.l.b16 %v1757
  %v2017 = vunpack.c.h.b16 %v1757
  %v2018 = vunpack.c.l.b16 %v1758
  %v2019 = vunpack.c.h.b16 %v1758
  %v2020 = vunpack.c.l.b16 %v1759
  %v2021 = vunpack.c.h.b16 %v1759
  %v2022 = vunpack.c.l.b16 %v1760
  %v2023 = vunpack.c.h.b16 %v1760
  %v2024 = vunpack.c.l.b16 %v1761
  %v2025 = vunpack.c.h.b16 %v1761
  %v2026 = vunpack.c.l.b16 %v1762
  %v2027 = vunpack.c.h.b16 %v1762
  %v2028 = vunpack.c.l.b16 %v1763
  %v2029 = vunpack.c.h.b16 %v1763
  %v2030 = vunpack.c.l.b16 %v1764
  %v2031 = vunpack.c.h.b16 %v1764
  %v2032 = vunpack.c.l.b16 %v1765
  %v2033 = vunpack.c.h.b16 %v1765
  %v2034 = vunpack.c.l.b16 %v1766
  %v2035 = vunpack.c.h.b16 %v1766
  %v2036 = vunpack.c.l.b16 %v1767
  %v2037 = vunpack.c.h.b16 %v1767
  %v2038 = vunpack.c.l.b16 %v1768
  %v2039 = vunpack.c.h.b16 %v1768
  %v2040 = vunpack.c.l.b16 %v1769
  %v2041 = vunpack.c.h.b16 %v1769
  %v2042 = vunpack.c.l.b16 %v1770
  %v2043 = vunpack.c.h.b16 %v1770
  %v2044 = vunpack.c.l.b16 %v1771
  %v2045 = vunpack.c.h.b16 %v1771
  %v2046 = vunpack.c.l.b16 %v1772
  %v2047 = vunpack.c.h.b16 %v1772
  %v2048 = vunpack.c.l.b16 %v1773
  %v2049 = vunpack.c.h.b16 %v1773
  %v2050 = vunpack.c.l.b16 %v1774
  %v2051 = vunpack.c.h.b16 %v1774
  %v2052 = vunpack.c.l.b16 %v1775
  %v2053 = vunpack.c.h.b16 %v1775
  %v2054 = vunpack.c.l.b16 %v1776
  %v2055 = vunpack.c.h.b16 %v1776
  %v2056 = vunpack.c.l.b16 %v1777
  %v2057 = vunpack.c.h.b16 %v1777
  %v2058 = vunpack.c.l.b16 %v1778
  %v2059 = vunpack.c.h.b16 %v1778
  %v2060 = vunpack.c.l.b16 %v1779
  %v2061 = vunpack.c.h.b16 %v1779
  %v2062 = vunpack.c.l.b16 %v1780
  %v2063 = vunpack.c.h.b16 %v1780
  %v2064 = vunpack.c.l.b16 %v1781
  %v2065 = vunpack.c.h.b16 %v1781
  %v2066 = vunpack.c.l.b16 %v1782
  %v2067 = vunpack.c.h.b16 %v1782
  %v2068 = vunpack.c.l.b16 %v1783
  %v2069 = vunpack.c.h.b16 %v1783
  %v2070 = vunpack.c.l.b16 %v1784
  %v2071 = vunpack.c.h.b16 %v1784
  %v2072 = vunpack.c.l.b16 %v1785
  %v2073 = vunpack.c.h.b16 %v1785
  %v2074 = vunpack.c.l.b16 %v1786
  %v2075 = vunpack.c.h.b16 %v1786
  %v2076 = vunpack.c.l.b16 %v1787
  %v2077 = vunpack.c.h.b16 %v1787
  %v2078 = vunpack.c.l.b16 %v1788
  %v2079 = vunpack.c.h.b16 %v1788
  %v2080 = vunpack.c.l.b16 %v1789
  %v2081 = vunpack.c.h.b16 %v1789
  %v2082 = vunpack.c.l.b16 %v1790
  %v2083 = vunpack.c.h.b16 %v1790
  %v2084 = vunpack.c.l.b16 %v1791
  %v2085 = vunpack.c.h.b16 %v1791
  %v2086 = vunpack.c.l.b16 %v1792
  %v2087 = vunpack.c.h.b16 %v1792
  %v2088 = vunpack.c.l.b16 %v1793
  %v2089 = vunpack.c.h.b16 %v1793
  %v2090 = vunpack.c.l.b16 %v1794
  %v2091 = vunpack.c.h.b16 %v1794
  %v2092 = vunpack.c.l.b16 %v1795
  %v2093 = vunpack.c.h.b16 %v1795
  %v2094 = vunpack.c.l.b16 %v1796
  %v2095 = vunpack.c.h.b16 %v1796
  %v2096 = vunpack.c.l.b16 %v1797
  %v2097 = vunpack.c.h.b16 %v1797
  %v2098 = vunpack.c.l.b16 %v1798
  %v2099 = vunpack.c.h.b16 %v1798
  %v2100 = vunpack.c.l.b16 %v1799
  %v2101 = vunpack.c.h.b16 %v1799
  %v2102 = vunpack.c.l.b16 %v1800
  %v2103 = vunpack.c.h.b16 %v1800
  %v2104 = vunpack.c.l.b16 %v1801
  %v2105 = vunpack.c.h.b16 %v1801
  %v2106 = vunpack.c.l.b16 %v1802
  %v2107 = vunpack.c.h.b16 %v1802
  %v2108 = vunpack.c.l.b16 %v1803
  %v2109 = vunpack.c.h.b16 %v1803
  %v2110 = vunpack.c.l.b16 %v1804
  %v2111 = vunpack.c.h.b16 %v1804
  %v2112 = vunpack.c.l.b16 %v1805
  %v2113 = vunpack.c.h.b16 %v1805
  %v2114 = vunpack.c.l.b16 %v1806
  %v2115 = vunpack.c.h.b16 %v1806
  %v2116 = vunpack.c.l.b16 %v1807
  %v2117 = vunpack.c.h.b16 %v1807
  %v2118 = vunpack.c.l.b16 %v1808
  %v2119 = vunpack.c.h.b16 %v1808
  %v2120 = vunpack.c.l.b16 %v1809
  %v2121 = vunpack.c.h.b16 %v1809
  %v2122 = vunpack.c.l.b16 %v1810
  %v2123 = vunpack.c.h.b16 %v1810
  %v2124 = vunpack.c.l.b16 %v1811
  %v2125 = vunpack.c.h.b16 %v1811
  %v2126 = vunpack.c.l.b16 %v1812
  %v2127 = vunpack.c.h.b16 %v1812
  %v2128 = vunpack.c.l.b16 %v1813
  %v2129 = vunpack.c.h.b16 %v1813
  %v2130 = vunpack.c.l.b16 %v1814
  %v2131 = vunpack.c.h.b16 %v1814
  %v2132 = vunpack.c.l.b16 %v1815
  %v2133 = vunpack.c.h.b16 %v1815
  %v2134 = vunpack.c.l.b16 %v1816
  %v2135 = vunpack.c.h.b16 %v1816
  %v2136 = vunpack.c.l.b16 %v1817
  %v2137 = vunpack.c.h.b16 %v1817
  %v2138 = vunpack.c.l.b16 %v1818
  %v2139 = vunpack.c.h.b16 %v1818
  %v2140 = vunpack.c.l.b16 %v1819
  %v2141 = vunpack.c.h.b16 %v1819
  %v2142 = vunpack.c.l.b16 %v1820
  %v2143 = vunpack.c.h.b16 %v1820
  %v2144 = vunpack.c.l.b16 %v1821
  %v2145 = vunpack.c.h.b16 %v1821
  %v2146 = vunpack.c.l.b16 %v1822
  %v2147 = vunpack.c.h.b16 %v1822
  %v2148 = vunpack.c.l.b16 %v1823
  %v2149 = vunpack.c.h.b16 %v1823
  %v2150 = vunpack.c.l.b16 %v1824
  %v2151 = vunpack.c.h.b16 %v1824
  %v2152 = vunpack.c.l.b16 %v1825
  %v2153 = vunpack.c.h.b16 %v1825
  %v2154 = vunpack.c.l.b16 %v1826
  %v2155 = vunpack.c.h.b16 %v1826
  %v2156 = vunpack.c.l.b16 %v1827
  %v2157 = vunpack.c.h.b16 %v1827
  %v2158 = vunpack.c.l.b16 %v1828
  %v2159 = vunpack.c.h.b16 %v1828
  %v2160 = vunpack.c.l.b16 %v1829
  %v2161 = vunpack.c.h.b16 %v1829
  %v2162 = vunpack.c.l.b16 %v1830
  %v2163 = vunpack.c.h.b16 %v1830
  %v2164 = vunpack.c.l.b16 %v1831
  %v2165 = vunpack.c.h.b16 %v1831
  %v2166 = vunpack.c.l.b16 %v1832
  %v2167 = vunpack.c.h.b16 %v1832
  %v2168 = vunpack.c.l.b16 %v1833
  %v2169 = vunpack.c.h.b16 %v1833
  %v2170 = vunpack.c.l.b16 %v1834
  %v2171 = vunpack.c.h.b16 %v1834
  %v2172 = vunpack.c.l.b16 %v1835
  %v2173 = vunpack.c.h.b16 %v1835
  %v2174 = vunpack.c.l.b16 %v1836
  %v2175 = vunpack.c.h.b16 %v1836
  %v2176 = vunpack.c.l.b16 %v1837
  %v2177 = vunpack.c.h.b16 %v1837
  %v2178 = vunpack.c.l.b16 %v1838
  %v2179 = vunpack.c.h.b16 %v1838
  %v2180 = vunpack.c.l.b16 %v1839
  %v2181 = vunpack.c.h.b16 %v1839
  %v2182 = vunpack.c.l.b16 %v1840
  %v2183 = vunpack.c.h.b16 %v1840
  %v2184 = vunpack.c.l.b16 %v1841
  %v2185 = vunpack.c.h.b16 %v1841
  %v2186 = vunpack.c.l.b16 %v1842
  %v2187 = vunpack.c.h.b16 %v1842
  %v2188 = vunpack.c.l.b16 %v1843
  %v2189 = vunpack.c.h.b16 %v1843
  %v2190 = vunpack.c.l.b16 %v1844
  %v2191 = vunpack.c.h.b16 %v1844
  %v2192 = vunpack.c.l.b16 %v1845
  %v2193 = vunpack.c.h.b16 %v1845
  %v2194 = vunpack.c.l.b16 %v1846
  %v2195 = vunpack.c.h.b16 %v1846
  %v2196 = vunpack.c.l.b16 %v1847
  %v2197 = vunpack.c.h.b16 %v1847
  %v2198 = vunpack.c.l.b16 %v1848
  %v2199 = vunpack.c.h.b16 %v1848
  %v2200 = vunpack.c.l.b16 %v1849
  %v2201 = vunpack.c.h.b16 %v1849
  %v2202 = vunpack.c.l.b16 %v1850
  %v2203 = vunpack.c.h.b16 %v1850
  %v2204 = vunpack.c.l.b16 %v1851
  %v2205 = vunpack.c.h.b16 %v1851
  %v2206 = vunpack.c.l.b16 %v1852
  %v2207 = vunpack.c.h.b16 %v1852
  %v2208 = vunpack.c.l.b16 %v1853
  %v2209 = vunpack.c.h.b16 %v1853
  %v2210 = vunpack.c.l.b16 %v1854
  %v2211 = vunpack.c.h.b16 %v1854
  %v2212 = vunpack.c.l.b16 %v1855
  %v2213 = vunpack.c.h.b16 %v1855
  %v2214 = vunpack.c.l.b16 %v1856
  %v2215 = vunpack.c.h.b16 %v1856
  %v2216 = vunpack.c.l.b16 %v1857
  %v2217 = vunpack.c.h.b16 %v1857
  %v2218 = vunpack.c.l.b16 %v1858
  %v2219 = vunpack.c.h.b16 %v1858
  %v2220 = vunpack.c.l.b16 %v1859
  %v2221 = vunpack.c.h.b16 %v1859
  %v2222 = vunpack.c.l.b16 %v1860
  %v2223 = vunpack.c.h.b16 %v1860
  %v2224 = vunpack.c.l.b16 %v1861
  %v2225 = vunpack.c.h.b16 %v1861
  %v2226 = vunpack.c.l.b16 %v1862
  %v2227 = vunpack.c.h.b16 %v1862
  %v2228 = vunpack.c.l.b16 %v1863
  %v2229 = vunpack.c.h.b16 %v1863
  %v2230 = vunpack.c.l.b16 %v1864
  %v2231 = vunpack.c.h.b16 %v1864
  %v2232 = vunpack.c.l.b16 %v1865
  %v2233 = vunpack.c.h.b16 %v1865
  %v2234 = vunpack.c.l.b16 %v1866
  %v2235 = vunpack.c.h.b16 %v1866
  %v2236 = vunpack.c.l.b16 %v1867
  %v2237 = vunpack.c.h.b16 %v1867
  %v2238 = vunpack.c.l.b16 %v1868
  %v2239 = vunpack.c.h.b16 %v1868
  %v2240 = vunpack.c.l.b16 %v1869
  %v2241 = vunpack.c.h.b16 %v1869
  %v2242 = vunpack.c.l.b16 %v1870
  %v2243 = vunpack.c.h.b16 %v1870
  %v2244 = vunpack.c.l.b16 %v1871
  %v2245 = vunpack.c.h.b16 %v1871
  %v2246 = vunpack.c.l.b16 %v1872
  %v2247 = vunpack.c.h.b16 %v1872
  %v2248 = vunpack.c.l.b16 %v1873
  %v2249 = vunpack.c.h.b16 %v1873
  %v2250 = vunpack.c.l.b16 %v1874
  %v2251 = vunpack.c.h.b16 %v1874
  %v2252 = vunpack.c.l.b16 %v1875
  %v2253 = vunpack.c.h.b16 %v1875
  %v2254 = vunpack.c.l.b16 %v1876
  %v2255 = vunpack.c.h.b16 %v1876
  %v2256 = vunpack.c.l.b16 %v1877
  %v2257 = vunpack.c.h.b16 %v1877
  %v2258 = vunpack.c.l.b16 %v1878
  %v2259 = vunpack.c.h.b16 %v1878
  %v2260 = vunpack.c.l.b16 %v1879
  %v2261 = vunpack.c.h.b16 %v1879
  %v2262 = vunpack.c.l.b16 %v1880
  %v2263 = vunpack.c.h.b16 %v1880
  %v2264 = vunpack.c.l.b16 %v1881
  %v2265 = vunpack.c.h.b16 %v1881
  %v2266 = vpack.c.b16 %v2014, %v2010
  %v2267 = vpack.c.b16 %v2015, %v2011
  %v2268 = vpack.c.b16 %v2016, %v2012
  %v2269 = vpack.c.b16 %v2017, %v2013
  %v2270 = vpack.c.b16 %v2022, %v2018
  %v2271 = vpack.c.b16 %v2023, %v2019
  %v2272 = vpack.c.b16 %v2024, %v2020
  %v2273 = vpack.c.b16 %v2025, %v2021
  %v2274 = vpack.c.b16 %v2030, %v2026
  %v2275 = vpack.c.b16 %v2031, %v2027
  %v2276 = vpack.c.b16 %v2032, %v2028
  %v2277 = vpack.c.b16 %v2033, %v2029
  %v2278 = vpack.c.b16 %v2038, %v2034
  %v2279 = vpack.c.b16 %v2039, %v2035
  %v2280 = vpack.c.b16 %v2040, %v2036
  %v2281 = vpack.c.b16 %v2041, %v2037
  %v2282 = vpack.c.b16 %v2046, %v2042
  %v2283 = vpack.c.b16 %v2047, %v2043
  %v2284 = vpack.c.b16 %v2048, %v2044
  %v2285 = vpack.c.b16 %v2049, %v2045
  %v2286 = vpack.c.b16 %v2054, %v2050
  %v2287 = vpack.c.b16 %v2055, %v2051
  %v2288 = vpack.c.b16 %v2056, %v2052
  %v2289 = vpack.c.b16 %v2057, %v2053
  %v2290 = vpack.c.b16 %v2062, %v2058
  %v2291 = vpack.c.b16 %v2063, %v2059
  %v2292 = vpack.c.b16 %v2064, %v2060
  %v2293 = vpack.c.b16 %v2065, %v2061
  %v2294 = vpack.c.b16 %v2070, %v2066
  %v2295 = vpack.c.b16 %v2071, %v2067
  %v2296 = vpack.c.b16 %v2072, %v2068
  %v2297 = vpack.c.b16 %v2073, %v2069
  %v2298 = vpack.c.b16 %v2078, %v2074
  %v2299 = vpack.c.b16 %v2079, %v2075
  %v2300 = vpack.c.b16 %v2080, %v2076
  %v2301 = vpack.c.b16 %v2081, %v2077
  %v2302 = vpack.c.b16 %v2086, %v2082
  %v2303 = vpack.c.b16 %v2087, %v2083
  %v2304 = vpack.c.b16 %v2088, %v2084
  %v2305 = vpack.c.b16 %v2089, %v2085
  %v2306 = vpack.c.b16 %v2094, %v2090
  %v2307 = vpack.c.b16 %v2095, %v2091
  %v2308 = vpack.c.b16 %v2096, %v2092
  %v2309 = vpack.c.b16 %v2097, %v2093
  %v2310 = vpack.c.b16 %v2102, %v2098
  %v2311 = vpack.c.b16 %v2103, %v2099
  %v2312 = vpack.c.b16 %v2104, %v2100
  %v2313 = vpack.c.b16 %v2105, %v2101
  %v2314 = vpack.c.b16 %v2110, %v2106
  %v2315 = vpack.c.b16 %v2111, %v2107
  %v2316 = vpack.c.b16 %v2112, %v2108
  %v2317 = vpack.c.b16 %v2113, %v2109
  %v2318 = vpack.c.b16 %v2118, %v2114
  %v2319 = vpack.c.b16 %v2119, %v2115
  %v2320 = vpack.c.b16 %v2120, %v2116
  %v2321 = vpack.c.b16 %v2121, %v2117
  %v2322 = vpack.c.b16 %v2126, %v2122
  %v2323 = vpack.c.b16 %v2127, %v2123
  %v2324 = vpack.c.b16 %v2128, %v2124
  %v2325 = vpack.c.b16 %v2129, %v2125
  %v2326 = vpack.c.b16 %v2134, %v2130
  %v2327 = vpack.c.b16 %v2135, %v2131
  %v2328 = vpack.c.b16 %v2136, %v2132
  %v2329 = vpack.c.b16 %v2137, %v2133
  %v2330 = vpack.c.b16 %v2142, %v2138
  %v2331 = vpack.c.b16 %v2143, %v2139
  %v2332 = vpack.c.b16 %v2144, %v2140
  %v2333 = vpack.c.b16 %v2145, %v2141
  %v2334 = vpack.c.b16 %v2150, %v2146
  %v2335 = vpack.c.b16 %v2151, %v2147
  %v2336 = vpack.c.b16 %v2152, %v2148
  %v2337 = vpack.c.b16 %v2153, %v2149
  %v2338 = vpack.c.b16 %v2158, %v2154
  %v2339 = vpack.c.b16 %v2159, %v2155
  %v2340 = vpack.c.b16 %v2160, %v2156
  %v2341 = vpack.c.b16 %v2161, %v2157
  %v2342 = vpack.c.b16 %v2166, %v2162
  %v2343 = vpack.c.b16 %v2167, %v2163
  %v2344 = vpack.c.b16 %v2168, %v2164
  %v2345 = vpack.c.b16 %v2169, %v2165
  %v2346 = vpack.c.b16 %v2174, %v2170
  %v2347 = vpack.c.b16 %v2175, %v2171
  %v2348 = vpack.c.b16 %v2176, %v2172
  %v2349 = vpack.c.b16 %v2177, %v2173
  %v2350 = vpack.c.b16 %v2182, %v2178
  %v2351 = vpack.c.b16 %v2183, %v2179
  %v2352 = vpack.c.b16 %v2184, %v2180
  %v2353 = vpack.c.b16 %v2185, %v2181
  %v2354 = vpack.c.b16 %v2190, %v2186
  %v2355 = vpack.c.b16 %v2191, %v2187
  %v2356 = vpack.c.b16 %v2192, %v2188
  %v2357 = vpack.c.b16 %v2193, %v2189
  %v2358 = vpack.c.b16 %v2198, %v2194
  %v2359 = vpack.c.b16 %v2199, %v2195
  %v2360 = vpack.c.b16 %v2200, %v2196
  %v2361 = vpack.c.b16 %v2201, %v2197
  %v2362 = vpack.c.b16 %v2206, %v2202
  %v2363 = vpack.c.b16 %v2207, %v2203
  %v2364 = vpack.c.b16 %v2208, %v2204
  %v2365 = vpack.c.b16 %v2209, %v2205
  %v2366 = vpack.c.b16 %v2214, %v2210
  %v2367 = vpack.c.b16 %v2215, %v2211
  %v2368 = vpack.c.b16 %v2216, %v2212
  %v2369 = vpack.c.b16 %v2217, %v2213
  %v2370 = vpack.c.b16 %v2222, %v2218
  %v2371 = vpack.c.b16 %v2223, %v2219
  %v2372 = vpack.c.b16 %v2224, %v2220
  %v2373 = vpack.c.b16 %v2225, %v2221
  %v2374 = vpack.c.b16 %v2230, %v2226
  %v2375 = vpack.c.b16 %v2231, %v2227
  %v2376 = vpack.c.b16 %v2232, %v2228
  %v2377 = vpack.c.b16 %v2233, %v2229
  %v2378 = vpack.c.b16 %v2238, %v2234
  %v2379 = vpack.c.b16 %v2239, %v2235
  %v2380 = vpack.c.b16 %v2240, %v2236
  %v2381 = vpack.c.b16 %v2241, %v2237
  %v2382 = vpack.c.b16 %v2246, %v2242
  %v2383 = vpack.c.b16 %v2247, %v2243
  %v2384 = vpack.c.b16 %v2248, %v2244
  %v2385 = vpack.c.b16 %v2249, %v2245
  %v2386 = vpack.c.b16 %v2254, %v2250
  %v2387 = vpack.c.b16 %v2255, %v2251
  %v2388 = vpack.c.b16 %v2256, %v2252
  %v2389 = vpack.c.b16 %v2257, %v2253
  %v2390 = vpack.c.b16 %v2262, %v2258
  %v2391 = vpack.c.b16 %v2263, %v2259
  %v2392 = vpack.c.b16 %v2264, %v2260
  %v2393 = vpack.c.b16 %v2265, %v2261
  %2522 = vmatpush.bf16.msra.mxu0 %v2294
  %2523 = vmatpush.bf16.msra.mxu0 %v2290
  %2524 = vmatpush.bf16.msra.mxu0 %v2286
  %2525 = vmatpush.bf16.msra.mxu0 %v2282
  %2526 = vmatpush.bf16.msra.mxu0 %v2278
  %2527 = vmatpush.bf16.msra.mxu0 %v2274
  %2528 = vmatpush.bf16.msra.mxu0 %v2270
  %2529 = vmatpush.bf16.msra.mxu0 %v2266
  %2530 = vmatmul.bf16.gmra.mxu0 %v1750
  %v2531 = vpop.f32.mrf.mxu0
  %v2532 = vadd.f32 0.0, %v2531
  %v2533 = vpop.f32.mrf.mxu0
  %v2534 = vadd.f32 0.0, %v2533
  %2535 = vdwg.mxu0
  %2536 = vmatpush.bf16.msra.mxu0 %v2326
  %2537 = vmatpush.bf16.msra.mxu0 %v2322
  %2538 = vmatpush.bf16.msra.mxu0 %v2318
  %2539 = vmatpush.bf16.msra.mxu0 %v2314
  %2540 = vmatpush.bf16.msra.mxu0 %v2310
  %2541 = vmatpush.bf16.msra.mxu0 %v2306
  %2542 = vmatpush.bf16.msra.mxu0 %v2302
  %2543 = vmatpush.bf16.msra.mxu0 %v2298
  %2544 = vmatmul.bf16.gmra.mxu0 %v1751
  %v2545 = vpop.f32.mrf.mxu0
  %v2546 = vadd.f32 %v2532, %v2545
  %v2547 = vpop.f32.mrf.mxu0
  %v2548 = vadd.f32 %v2534, %v2547
  %2549 = vdwg.mxu0
  %2550 = vmatpush.bf16.msra.mxu0 %v2358
  %2551 = vmatpush.bf16.msra.mxu0 %v2354
  %2552 = vmatpush.bf16.msra.mxu0 %v2350
  %2553 = vmatpush.bf16.msra.mxu0 %v2346
  %2554 = vmatpush.bf16.msra.mxu0 %v2342
  %2555 = vmatpush.bf16.msra.mxu0 %v2338
  %2556 = vmatpush.bf16.msra.mxu0 %v2334
  %2557 = vmatpush.bf16.msra.mxu0 %v2330
  %2558 = vmatmul.bf16.gmra.mxu0 %v1752
  %v2559 = vpop.f32.mrf.mxu0
  %v2560 = vadd.f32 %v2546, %v2559
  %v2561 = vpop.f32.mrf.mxu0
  %v2562 = vadd.f32 %v2548, %v2561
  %2563 = vdwg.mxu0
  %2564 = vmatpush.bf16.msra.mxu0 %v2390
  %2565 = vmatpush.bf16.msra.mxu0 %v2386
  %2566 = vmatpush.bf16.msra.mxu0 %v2382
  %2567 = vmatpush.bf16.msra.mxu0 %v2378
  %2568 = vmatpush.bf16.msra.mxu0 %v2374
  %2569 = vmatpush.bf16.msra.mxu0 %v2370
  %2570 = vmatpush.bf16.msra.mxu0 %v2366
  %2571 = vmatpush.bf16.msra.mxu0 %v2362
  %2572 = vmatmul.bf16.gmra.mxu0 %v1753
  %v2573 = vpop.f32.mrf.mxu0
  %v2574 = vadd.f32 %v2560, %v2573
  %v2575 = vpop.f32.mrf.mxu0
  %v2576 = vadd.f32 %v2562, %v2575
  %2577 = vdwg.mxu0
  %2578 = vmatpush.bf16.msra.mxu0 %v2295
  %2579 = vmatpush.bf16.msra.mxu0 %v2291
  %2580 = vmatpush.bf16.msra.mxu0 %v2287
  %2581 = vmatpush.bf16.msra.mxu0 %v2283
  %2582 = vmatpush.bf16.msra.mxu0 %v2279
  %2583 = vmatpush.bf16.msra.mxu0 %v2275
  %2584 = vmatpush.bf16.msra.mxu0 %v2271
  %2585 = vmatpush.bf16.msra.mxu0 %v2267
  %2586 = vmatmul.bf16.gmra.mxu0 %v1750
  %v2587 = vpop.f32.mrf.mxu0
  %v2588 = vadd.f32 0.0, %v2587
  %v2589 = vpop.f32.mrf.mxu0
  %v2590 = vadd.f32 0.0, %v2589
  %2591 = vdwg.mxu0
  %2592 = vmatpush.bf16.msra.mxu0 %v2327
  %2593 = vmatpush.bf16.msra.mxu0 %v2323
  %2594 = vmatpush.bf16.msra.mxu0 %v2319
  %2595 = vmatpush.bf16.msra.mxu0 %v2315
  %2596 = vmatpush.bf16.msra.mxu0 %v2311
  %2597 = vmatpush.bf16.msra.mxu0 %v2307
  %2598 = vmatpush.bf16.msra.mxu0 %v2303
  %2599 = vmatpush.bf16.msra.mxu0 %v2299
  %2600 = vmatmul.bf16.gmra.mxu0 %v1751
  %v2601 = vpop.f32.mrf.mxu0
  %v2602 = vadd.f32 %v2588, %v2601
  %v2603 = vpop.f32.mrf.mxu0
  %v2604 = vadd.f32 %v2590, %v2603
  %2605 = vdwg.mxu0
  %2606 = vmatpush.bf16.msra.mxu0 %v2359
  %2607 = vmatpush.bf16.msra.mxu0 %v2355
  %2608 = vmatpush.bf16.msra.mxu0 %v2351
  %2609 = vmatpush.bf16.msra.mxu0 %v2347
  %2610 = vmatpush.bf16.msra.mxu0 %v2343
  %2611 = vmatpush.bf16.msra.mxu0 %v2339
  %2612 = vmatpush.bf16.msra.mxu0 %v2335
  %2613 = vmatpush.bf16.msra.mxu0 %v2331
  %2614 = vmatmul.bf16.gmra.mxu0 %v1752
  %v2615 = vpop.f32.mrf.mxu0
  %v2616 = vadd.f32 %v2602, %v2615
  %v2617 = vpop.f32.mrf.mxu0
  %v2618 = vadd.f32 %v2604, %v2617
  %2619 = vdwg.mxu0
  %2620 = vmatpush.bf16.msra.mxu0 %v2391
  %2621 = vmatpush.bf16.msra.mxu0 %v2387
  %2622 = vmatpush.bf16.msra.mxu0 %v2383
  %2623 = vmatpush.bf16.msra.mxu0 %v2379
  %2624 = vmatpush.bf16.msra.mxu0 %v2375
  %2625 = vmatpush.bf16.msra.mxu0 %v2371
  %2626 = vmatpush.bf16.msra.mxu0 %v2367
  %2627 = vmatpush.bf16.msra.mxu0 %v2363
  %2628 = vmatmul.bf16.gmra.mxu0 %v1753
  %v2629 = vpop.f32.mrf.mxu0
  %v2630 = vadd.f32 %v2616, %v2629
  %v2631 = vpop.f32.mrf.mxu0
  %v2632 = vadd.f32 %v2618, %v2631
  %2633 = vdwg.mxu0
  %2634 = vmatpush.bf16.msra.mxu0 %v2296
  %2635 = vmatpush.bf16.msra.mxu0 %v2292
  %2636 = vmatpush.bf16.msra.mxu0 %v2288
  %2637 = vmatpush.bf16.msra.mxu0 %v2284
  %2638 = vmatpush.bf16.msra.mxu0 %v2280
  %2639 = vmatpush.bf16.msra.mxu0 %v2276
  %2640 = vmatpush.bf16.msra.mxu0 %v2272
  %2641 = vmatpush.bf16.msra.mxu0 %v2268
  %2642 = vmatmul.bf16.gmra.mxu0 %v1750
  %v2643 = vpop.f32.mrf.mxu0
  %v2644 = vadd.f32 0.0, %v2643
  %v2645 = vpop.f32.mrf.mxu0
  %v2646 = vadd.f32 0.0, %v2645
  %2647 = vdwg.mxu0
  %2648 = vmatpush.bf16.msra.mxu0 %v2328
  %2649 = vmatpush.bf16.msra.mxu0 %v2324
  %2650 = vmatpush.bf16.msra.mxu0 %v2320
  %2651 = vmatpush.bf16.msra.mxu0 %v2316
  %2652 = vmatpush.bf16.msra.mxu0 %v2312
  %2653 = vmatpush.bf16.msra.mxu0 %v2308
  %2654 = vmatpush.bf16.msra.mxu0 %v2304
  %2655 = vmatpush.bf16.msra.mxu0 %v2300
  %2656 = vmatmul.bf16.gmra.mxu0 %v1751
  %v2657 = vpop.f32.mrf.mxu0
  %v2658 = vadd.f32 %v2644, %v2657
  %v2659 = vpop.f32.mrf.mxu0
  %v2660 = vadd.f32 %v2646, %v2659
  %2661 = vdwg.mxu0
  %2662 = vmatpush.bf16.msra.mxu0 %v2360
  %2663 = vmatpush.bf16.msra.mxu0 %v2356
  %2664 = vmatpush.bf16.msra.mxu0 %v2352
  %2665 = vmatpush.bf16.msra.mxu0 %v2348
  %2666 = vmatpush.bf16.msra.mxu0 %v2344
  %2667 = vmatpush.bf16.msra.mxu0 %v2340
  %2668 = vmatpush.bf16.msra.mxu0 %v2336
  %2669 = vmatpush.bf16.msra.mxu0 %v2332
  %2670 = vmatmul.bf16.gmra.mxu0 %v1752
  %v2671 = vpop.f32.mrf.mxu0
  %v2672 = vadd.f32 %v2658, %v2671
  %v2673 = vpop.f32.mrf.mxu0
  %v2674 = vadd.f32 %v2660, %v2673
  %2675 = vdwg.mxu0
  %2676 = vmatpush.bf16.msra.mxu0 %v2392
  %2677 = vmatpush.bf16.msra.mxu0 %v2388
  %2678 = vmatpush.bf16.msra.mxu0 %v2384
  %2679 = vmatpush.bf16.msra.mxu0 %v2380
  %2680 = vmatpush.bf16.msra.mxu0 %v2376
  %2681 = vmatpush.bf16.msra.mxu0 %v2372
  %2682 = vmatpush.bf16.msra.mxu0 %v2368
  %2683 = vmatpush.bf16.msra.mxu0 %v2364
  %2684 = vmatmul.bf16.gmra.mxu0 %v1753
  %v2685 = vpop.f32.mrf.mxu0
  %v2686 = vadd.f32 %v2672, %v2685
  %v2687 = vpop.f32.mrf.mxu0
  %v2688 = vadd.f32 %v2674, %v2687
  %2689 = vdwg.mxu0
  %2690 = vmatpush.bf16.msra.mxu0 %v2297
  %2691 = vmatpush.bf16.msra.mxu0 %v2293
  %2692 = vmatpush.bf16.msra.mxu0 %v2289
  %2693 = vmatpush.bf16.msra.mxu0 %v2285
  %2694 = vmatpush.bf16.msra.mxu0 %v2281
  %2695 = vmatpush.bf16.msra.mxu0 %v2277
  %2696 = vmatpush.bf16.msra.mxu0 %v2273
  %2697 = vmatpush.bf16.msra.mxu0 %v2269
  %2698 = vmatmul.bf16.gmra.mxu0 %v1750
  %v2699 = vpop.f32.mrf.mxu0
  %v2700 = vadd.f32 0.0, %v2699
  %v2701 = vpop.f32.mrf.mxu0
  %v2702 = vadd.f32 0.0, %v2701
  %2703 = vdwg.mxu0
  %2704 = vmatpush.bf16.msra.mxu0 %v2329
  %2705 = vmatpush.bf16.msra.mxu0 %v2325
  %2706 = vmatpush.bf16.msra.mxu0 %v2321
  %2707 = vmatpush.bf16.msra.mxu0 %v2317
  %2708 = vmatpush.bf16.msra.mxu0 %v2313
  %2709 = vmatpush.bf16.msra.mxu0 %v2309
  %2710 = vmatpush.bf16.msra.mxu0 %v2305
  %2711 = vmatpush.bf16.msra.mxu0 %v2301
  %2712 = vmatmul.bf16.gmra.mxu0 %v1751
  %v2713 = vpop.f32.mrf.mxu0
  %v2714 = vadd.f32 %v2700, %v2713
  %v2715 = vpop.f32.mrf.mxu0
  %v2716 = vadd.f32 %v2702, %v2715
  %2717 = vdwg.mxu0
  %2718 = vmatpush.bf16.msra.mxu0 %v2361
  %2719 = vmatpush.bf16.msra.mxu0 %v2357
  %2720 = vmatpush.bf16.msra.mxu0 %v2353
  %2721 = vmatpush.bf16.msra.mxu0 %v2349
  %2722 = vmatpush.bf16.msra.mxu0 %v2345
  %2723 = vmatpush.bf16.msra.mxu0 %v2341
  %2724 = vmatpush.bf16.msra.mxu0 %v2337
  %2725 = vmatpush.bf16.msra.mxu0 %v2333
  %2726 = vmatmul.bf16.gmra.mxu0 %v1752
  %v2727 = vpop.f32.mrf.mxu0
  %v2728 = vadd.f32 %v2714, %v2727
  %v2729 = vpop.f32.mrf.mxu0
  %v2730 = vadd.f32 %v2716, %v2729
  %2731 = vdwg.mxu0
  %2732 = vmatpush.bf16.msra.mxu0 %v2393
  %2733 = vmatpush.bf16.msra.mxu0 %v2389
  %2734 = vmatpush.bf16.msra.mxu0 %v2385
  %2735 = vmatpush.bf16.msra.mxu0 %v2381
  %2736 = vmatpush.bf16.msra.mxu0 %v2377
  %2737 = vmatpush.bf16.msra.mxu0 %v2373
  %2738 = vmatpush.bf16.msra.mxu0 %v2369
  %2739 = vmatpush.bf16.msra.mxu0 %v2365
  %2740 = vmatmul.bf16.gmra.mxu0 %v1753
  %v2741 = vpop.f32.mrf.mxu0
  %v2742 = vadd.f32 %v2728, %v2741
  %v2743 = vpop.f32.mrf.mxu0
  %v2744 = vadd.f32 %v2730, %v2743
  %2745 = vdwg.mxu0
  %v2746 = vadd.f32 %v2574, %v2576
  %v2747 = vrot.slane %v2746, 4
  %v2748 = vadd.f32 %v2746, %v2747
  %v2749 = vrot.slane %v2748, 2
  %v2750 = vadd.f32 %v2748, %v2749
  %v2751 = vrot.slane %v2750, 1
  %v2752 = vadd.f32 %v2750, %v2751
  %v2753 = vadd.f32 %v2630, %v2632
  %v2754 = vrot.slane %v2753, 4
  %v2755 = vadd.f32 %v2753, %v2754
  %v2756 = vrot.slane %v2755, 2
  %v2757 = vadd.f32 %v2755, %v2756
  %v2758 = vrot.slane %v2757, 1
  %v2759 = vadd.f32 %v2757, %v2758
  %v2760 = vadd.f32 %v2686, %v2688
  %v2761 = vrot.slane %v2760, 4
  %v2762 = vadd.f32 %v2760, %v2761
  %v2763 = vrot.slane %v2762, 2
  %v2764 = vadd.f32 %v2762, %v2763
  %v2765 = vrot.slane %v2764, 1
  %v2766 = vadd.f32 %v2764, %v2765
  %v2767 = vadd.f32 %v2742, %v2744
  %v2768 = vrot.slane %v2767, 4
  %v2769 = vadd.f32 %v2767, %v2768
  %v2770 = vrot.slane %v2769, 2
  %v2771 = vadd.f32 %v2769, %v2770
  %v2772 = vrot.slane %v2771, 1
  %v2773 = vadd.f32 %v2771, %v2772
  %v2774 = vmul.f32 %v2752, %v93
  %v2775 = vmul.f32 %v2759, %v93
  %v2776 = vmul.f32 %v2766, %v93
  %v2777 = vmul.f32 %v2773, %v93
  %v2778 = vmul.f32 %v2574, %v2574
  %v2779 = vmul.f32 %v2630, %v2630
  %v2780 = vmul.f32 %v2686, %v2686
  %v2781 = vmul.f32 %v2742, %v2742
  %v2782 = vmul.f32 %v2576, %v2576
  %v2783 = vmul.f32 %v2632, %v2632
  %v2784 = vmul.f32 %v2688, %v2688
  %v2785 = vmul.f32 %v2744, %v2744
  %v2786 = vadd.f32 %v2778, %v2782
  %v2787 = vrot.slane %v2786, 4
  %v2788 = vadd.f32 %v2786, %v2787
  %v2789 = vrot.slane %v2788, 2
  %v2790 = vadd.f32 %v2788, %v2789
  %v2791 = vrot.slane %v2790, 1
  %v2792 = vadd.f32 %v2790, %v2791
  %v2793 = vadd.f32 %v2779, %v2783
  %v2794 = vrot.slane %v2793, 4
  %v2795 = vadd.f32 %v2793, %v2794
  %v2796 = vrot.slane %v2795, 2
  %v2797 = vadd.f32 %v2795, %v2796
  %v2798 = vrot.slane %v2797, 1
  %v2799 = vadd.f32 %v2797, %v2798
  %v2800 = vadd.f32 %v2780, %v2784
  %v2801 = vrot.slane %v2800, 4
  %v2802 = vadd.f32 %v2800, %v2801
  %v2803 = vrot.slane %v2802, 2
  %v2804 = vadd.f32 %v2802, %v2803
  %v2805 = vrot.slane %v2804, 1
  %v2806 = vadd.f32 %v2804, %v2805
  %v2807 = vadd.f32 %v2781, %v2785
  %v2808 = vrot.slane %v2807, 4
  %v2809 = vadd.f32 %v2807, %v2808
  %v2810 = vrot.slane %v2809, 2
  %v2811 = vadd.f32 %v2809, %v2810
  %v2812 = vrot.slane %v2811, 1
  %v2813 = vadd.f32 %v2811, %v2812
  %v2814 = vmul.f32 %v2792, %v93
  %v2815 = vmul.f32 %v2799, %v93
  %v2816 = vmul.f32 %v2806, %v93
  %v2817 = vmul.f32 %v2813, %v93
  %v2818 = vmul.f32 %v2774, %v2774
  %v2819 = vmul.f32 %v2775, %v2775
  %v2820 = vmul.f32 %v2776, %v2776
  %v2821 = vmul.f32 %v2777, %v2777
  %v2822 = vsub.f32 %v2814, %v2818
  %v2823 = vsub.f32 %v2815, %v2819
  %v2824 = vsub.f32 %v2816, %v2820
  %v2825 = vsub.f32 %v2817, %v2821
  %v2826 = vmax.f32 %v2822, 0.0
  %v2827 = vmax.f32 %v2823, 0.0
  %v2828 = vmax.f32 %v2824, 0.0
  %v2829 = vmax.f32 %v2825, 0.0
  %v2830 = vsub.f32 %v2574, %v2774
  %v2831 = vsub.f32 %v2630, %v2775
  %v2832 = vsub.f32 %v2686, %v2776
  %v2833 = vsub.f32 %v2742, %v2777
  %v2834 = vsub.f32 %v2576, %v2774
  %v2835 = vsub.f32 %v2632, %v2775
  %v2836 = vsub.f32 %v2688, %v2776
  %v2837 = vsub.f32 %v2744, %v2777
  %v2838 = vadd.f32 %v2826, 1e-05
  %v2839 = vadd.f32 %v2827, 1e-05
  %v2840 = vadd.f32 %v2828, 1e-05
  %v2841 = vadd.f32 %v2829, 1e-05
  %v2842 = vrsqrt.pop %v2838
  %v2843 = vmul.f32 %v2842, %v2838
  %v2844 = vmul.f32 %v2843, %v2842
  %v2845 = vmul.f32 0.5, %v2844
  %v2846 = vsub.f32 1.5, %v2845
  %v2847 = vmul.f32 %v2842, %v2846
  %vm2848 = vweird.f32 %v2838
  %vm2849 = vweird.f32 %v2842
  %vm2850 = vmor %vm2848, %vm2849
  %v2851 = vsel %vm2850, %v2842, %v2847
  %v2852 = vrsqrt.pop %v2839
  %v2853 = vmul.f32 %v2852, %v2839
  %v2854 = vmul.f32 %v2853, %v2852
  %v2855 = vmul.f32 0.5, %v2854
  %v2856 = vsub.f32 1.5, %v2855
  %v2857 = vmul.f32 %v2852, %v2856
  %vm2858 = vweird.f32 %v2839
  %vm2859 = vweird.f32 %v2852
  %vm2860 = vmor %vm2858, %vm2859
  %v2861 = vsel %vm2860, %v2852, %v2857
  %v2862 = vrsqrt.pop %v2840
  %v2863 = vmul.f32 %v2862, %v2840
  %v2864 = vmul.f32 %v2863, %v2862
  %v2865 = vmul.f32 0.5, %v2864
  %v2866 = vsub.f32 1.5, %v2865
  %v2867 = vmul.f32 %v2862, %v2866
  %vm2868 = vweird.f32 %v2840
  %vm2869 = vweird.f32 %v2862
  %vm2870 = vmor %vm2868, %vm2869
  %v2871 = vsel %vm2870, %v2862, %v2867
  %v2872 = vrsqrt.pop %v2841
  %v2873 = vmul.f32 %v2872, %v2841
  %v2874 = vmul.f32 %v2873, %v2872
  %v2875 = vmul.f32 0.5, %v2874
  %v2876 = vsub.f32 1.5, %v2875
  %v2877 = vmul.f32 %v2872, %v2876
  %vm2878 = vweird.f32 %v2841
  %vm2879 = vweird.f32 %v2872
  %vm2880 = vmor %vm2878, %vm2879
  %v2881 = vsel %vm2880, %v2872, %v2877
  %v2882 = vmul.f32 %v2830, %v2851
  %v2883 = vmul.f32 %v2831, %v2861
  %v2884 = vmul.f32 %v2832, %v2871
  %v2885 = vmul.f32 %v2833, %v2881
  %v2886 = vmul.f32 %v2834, %v2851
  %v2887 = vmul.f32 %v2835, %v2861
  %v2888 = vmul.f32 %v2836, %v2871
  %v2889 = vmul.f32 %v2837, %v2881
  %v2890 = vadd.f32 %v2882, %v1088
  %v2891 = vadd.f32 %v2883, %v1089
  %v2892 = vadd.f32 %v2884, %v1088
  %v2893 = vadd.f32 %v2885, %v1089
  %v2894 = vadd.f32 %v2886, %v1090
  %v2895 = vadd.f32 %v2887, %v1091
  %v2896 = vadd.f32 %v2888, %v1090
  %v2897 = vadd.f32 %v2889, %v1091
  %v2898 = vmax.f32 %v2890, 0.0
  %v2899 = vmax.f32 %v2891, 0.0
  %v2900 = vmax.f32 %v2892, 0.0
  %v2901 = vmax.f32 %v2893, 0.0
  %v2902 = vmax.f32 %v2894, 0.0
  %v2903 = vmax.f32 %v2895, 0.0
  %v2904 = vmax.f32 %v2896, 0.0
  %v2905 = vmax.f32 %v2897, 0.0
  %v2906 = vpack.c.bf16 %v2899, %v2898
  %v2907 = vpack.c.bf16 %v2901, %v2900
  %v2908 = vpack.c.bf16 %v2903, %v2902
  %v2909 = vpack.c.bf16 %v2905, %v2904
  %v2910 = vunpack.c.l.bf16 %v2906
  %v2911 = vunpack.c.h.bf16 %v2906
  %v2912 = vunpack.c.l.bf16 %v2907
  %v2913 = vunpack.c.h.bf16 %v2907
  %v2914 = vunpack.c.l.bf16 %v2908
  %v2915 = vunpack.c.h.bf16 %v2908
  %v2916 = vunpack.c.l.bf16 %v2909
  %v2917 = vunpack.c.h.bf16 %v2909
  %v2918 = vrot.slane %v2910, 4
  %v2919 = vadd.f32 %v2910, %v2918
  %v2920 = vrot.slane %v2919, 2
  %v2921 = vadd.f32 %v2919, %v2920
  %v2922 = vrot.slane %v2921, 1
  %v2923 = vadd.f32 %v2921, %v2922
  %v2924 = vrot.slane %v2911, 4
  %v2925 = vadd.f32 %v2911, %v2924
  %v2926 = vrot.slane %v2925, 2
  %v2927 = vadd.f32 %v2925, %v2926
  %v2928 = vrot.slane %v2927, 1
  %v2929 = vadd.f32 %v2927, %v2928
  %v2930 = vrot.slane %v2912, 4
  %v2931 = vadd.f32 %v2912, %v2930
  %v2932 = vrot.slane %v2931, 2
  %v2933 = vadd.f32 %v2931, %v2932
  %v2934 = vrot.slane %v2933, 1
  %v2935 = vadd.f32 %v2933, %v2934
  %v2936 = vrot.slane %v2913, 4
  %v2937 = vadd.f32 %v2913, %v2936
  %v2938 = vrot.slane %v2937, 2
  %v2939 = vadd.f32 %v2937, %v2938
  %v2940 = vrot.slane %v2939, 1
  %v2941 = vadd.f32 %v2939, %v2940
  %v2942 = vrot.slane %v2914, 4
  %v2943 = vadd.f32 %v2914, %v2942
  %v2944 = vrot.slane %v2943, 2
  %v2945 = vadd.f32 %v2943, %v2944
  %v2946 = vrot.slane %v2945, 1
  %v2947 = vadd.f32 %v2945, %v2946
  %v2948 = vrot.slane %v2915, 4
  %v2949 = vadd.f32 %v2915, %v2948
  %v2950 = vrot.slane %v2949, 2
  %v2951 = vadd.f32 %v2949, %v2950
  %v2952 = vrot.slane %v2951, 1
  %v2953 = vadd.f32 %v2951, %v2952
  %v2954 = vrot.slane %v2916, 4
  %v2955 = vadd.f32 %v2916, %v2954
  %v2956 = vrot.slane %v2955, 2
  %v2957 = vadd.f32 %v2955, %v2956
  %v2958 = vrot.slane %v2957, 1
  %v2959 = vadd.f32 %v2957, %v2958
  %v2960 = vrot.slane %v2917, 4
  %v2961 = vadd.f32 %v2917, %v2960
  %v2962 = vrot.slane %v2961, 2
  %v2963 = vadd.f32 %v2961, %v2962
  %v2964 = vrot.slane %v2963, 1
  %v2965 = vadd.f32 %v2963, %v2964
  %v2966 = vrcp.pop 8.0
  %v2967 = vmul.f32 8.0, %v2966
  %v2968 = vsub.f32 1.0, %v2967
  %v2969 = vmul.f32 %v2966, %v2968
  %v2970 = vadd.f32 %v2966, %v2969
  %vm2971 = vweird.f32 %v2966
  %v2972 = vsel %vm2971, %v2966, %v2970
  %v2973 = vmul.f32 %v2923, %v2972
  %v2974 = vmul.f32 %v2929, %v2972
  %v2975 = vmul.f32 %v2935, %v2972
  %v2976 = vmul.f32 %v2941, %v2972
  %v2977 = vmul.f32 %v2947, %v2972
  %v2978 = vmul.f32 %v2953, %v2972
  %v2979 = vmul.f32 %v2959, %v2972
  %v2980 = vmul.f32 %v2965, %v2972
  %v2981 = vld [vmem:[%s10] sm:$0xf]
  %v2983 = vperm.slane %v2981, 0
  %v2984 = vperm.slane %v2981, 1
  %v2985 = vperm.slane %v2981, 2
  %v2986 = vperm.slane %v2981, 3
  %v2991 = vmul.f32 %v2973, %v2983
  %v2992 = vmul.f32 %v2974, %v2984
  %v2993 = vmul.f32 %v2975, %v2985
  %v2994 = vmul.f32 %v2976, %v2986
  %v2995 = vmul.f32 %v2977, %v2983
  %v2996 = vmul.f32 %v2978, %v2984
  %v2997 = vmul.f32 %v2979, %v2985
  %v2998 = vmul.f32 %v2980, %v2986
  %v3007 = vrot.slane %v2995, 7
  %vm3008 = vcmask 1041409
  %v3009 = vsel %vm3008, %v3007, %v2991
  %v3010 = vrot.slane %v2996, 7
  %v3011 = vsel %vm3008, %v3010, %v2992
  %v3012 = vrot.slane %v2997, 7
  %v3013 = vsel %vm3008, %v3012, %v2993
  %v3014 = vrot.slane %v2998, 7
  %v3015 = vsel %vm3008, %v3014, %v2994
  %vm3020 = vcmask 1041408
  %v3021 = vsel %vm3020, %v3009, 0.0
  %v3022 = vsel %vm3020, %v3011, 0.0
  %v3023 = vadd.f32 %v3021, %v3022
  %v3024 = vsel %vm3020, %v3013, 0.0
  %v3025 = vadd.f32 %v3023, %v3024
  %v3026 = vsel %vm3020, %v3015, 0.0
  %v3027 = vadd.f32 %v3025, %v3026
  %3028 = vadd.xlane.f32.xlu0 %v3027
  %v3029 = vpop.xlane.xlu0 %3028
  %v3030 = vld [vmem:[#allocation2] sm:$0x1]
  %v3032 = vperm.slane %v3030, 0
  %v3034 = vadd.f32 %v3029, %v3032
  %vm3035 = vcmask 1024
  %3036 = vst.msk [vmem:[%s12] sm:$0x3] %vm3035, %v3034
  // Predicated region
  $region50: #{model_forward.1} parent=0 // pred_check
    _
  $region51: #{model_forward.1} parent=0 // pred_check_branch
    %3038 = sbr.rel (0) target = $region53
  $region52: #{model_forward.1} parent=0 // pred_region
    _
  $region53: #{model_forward.1} parent=0 // pred_fallthru
    _
  // Predicated region
  $region54: #{model_forward.1} parent=0 // pred_check
    _
  $region55: #{model_forward.1} parent=0 // pred_check_branch
    %3040 = sbr.rel (0) target = $region57
  $region56: #{model_forward.1} parent=0 // pred_region
    _
  $region57: #{model_forward.1} parent=0 // pred_fallthru
    _

</llo_original>
